<compile_context>
chip_gen: v5e
topology: v5e:2x2
jax: 0.10.0
libtpu: 0.0.40
codegen_flags: <defaults>
</compile_context>

<pallas_src>
import functools

import jax
import jax.numpy as jnp
import numpy as np
from jax.experimental import pallas as pl
from jax.experimental.pallas import tpu as pltpu


def _round_up(x, m):
    return (x + m - 1) // m * m


def _pick_batch_block(n, ho_pad):
    """Batch elements per grid step.

    Prefer the smallest divisor of n that puts >= 256 output columns on the lane
    axis (unmasked, lane-dense stores); otherwise run the whole batch in a single
    step — at small shapes the ~600-cycle per-grid-step overhead dwarfs these
    matmuls, so fewer steps is strictly better (v7x's two TensorCores only benefit
    from >1 "parallel" step when each step carries real work).
    """
    for d in range(1, n + 1):
        if n % d == 0 and d * ho_pad >= 256:
            return d
    return n


def _fused_inception_kernel(x_ref, w_ref, shift_ref, o_ref, *, win, ho_pad, precision):
    """All conv+BN+tanh branches for one block of TB batch elements: one MXU matmul.

    x_ref:     (TB, Hs, CWp)            zero-padded input slab shared by all branches
    w_ref:     (OC_total, K)            BN/bias-folded weights, K = win*CWp
    shift_ref: (OC_total, 1)            folded conv-bias + BN shift
    o_ref:     (1, OC_total, TB*Ho_pad) concatenated output block (lane-dense)
    """
    slab = x_ref[...]                            # single load of the (TB, Hs, CWp) block
    tb, _, cwp = slab.shape
    # In-VMEM im2row: `win` shifted row-windows of the slab, concatenated on the lane
    # axis.  CWp % 128 == 0 so each tap lands on its own lane-tile (pure placement),
    # and ho_pad % 8 == 0 so the row merge below is sublane-tile aligned.
    xk = jnp.concatenate([slab[:, j:j + ho_pad, :] for j in range(win)], axis=-1)
    xk = xk.reshape(tb * ho_pad, win * cwp)      # (TB*Ho_pad, K)
    # One matmul contracting the lane-dense, 128-aligned K axis -> (OC_total, TB*Ho_pad):
    # batch*rows sit on the output lane axis, so stores are unmasked for real batches.
    acc = jax.lax.dot_general(
        w_ref[...], xk,
        dimension_numbers=(((1,), (1,)), ((), ())),
        preferred_element_type=jnp.float32,
        precision=precision)
    o_ref[0] = jnp.tanh(acc + shift_ref[...]).astype(o_ref.dtype)


def make_inception_forward(params, in_channel, emb_dim, *, use_bf16=False,
                           precision=None, eps=1e-5):
    """Folds the 3 (Conv2d + BatchNorm2d(eval) + Tanh) branches into one
    (OC_total, K) weight / (OC_total, 1) shift pair and returns a jitted forward
    running ONE pallas_call over a batch-blocked grid.

    `precision` applies to the f32-operand matmul only.  Leave it at None (DEFAULT)
    or use use_bf16=True for production; pass jax.lax.Precision.HIGHEST only for
    tight-tolerance tests (HIGHEST costs several extra MXU passes).
    """
    C, W = int(in_channel), int(emb_dim)
    kHs = [int(p["weight"].shape[2]) for p in params]
    pads = [int(p["pad"]) for p in params]
    ocs = [int(p["weight"].shape[0]) for p in params]
    oc_total = sum(ocs)

    # torch.cat(dim=1) requires identical output length for every branch:
    # Ho_b = H + 2*pad_b - kH_b + 1  =>  2*pad_b - kH_b must be branch-invariant.
    deltas = {2 * pd - kh for kh, pd in zip(kHs, pads)}
    assert len(deltas) == 1, f"branches disagree on output length: {deltas}"
    ho_off = deltas.pop() + 1                        # Ho = H + ho_off

    max_pad = max(pads)
    offs = [max_pad - pd for pd in pads]             # branch start tap in shared window
    win_start = min(offs)                            # == 0 by construction
    win = max(o + kh for o, kh in zip(offs, kHs)) - win_start
    cw = C * W
    cwp = _round_up(cw, 128)                         # lane-align every tap chunk
    K = win * cwp
    op_dtype = jnp.bfloat16 if use_bf16 else jnp.float32
    out_dtype = jnp.bfloat16 if use_bf16 else jnp.float32
    mm_precision = None if use_bf16 else precision

    # ---- fold conv bias + inference BatchNorm into the matmul operands ----
    w_rows, shifts = [], []
    for p, off, kh, ocb in zip(params, offs, kHs, ocs):
        wgt = p["weight"]                            # (OCb, C, kH, kW)
        assert int(wgt.shape[3]) == W, "filter_height must span the embedding dim"
        # TODO(synk): general filter_height < emb_dim (output width > 1) not implemented;
        # ABCNN always uses filter_height == embedding dim so the width axis collapses to 1.
        scale = p["gamma"] * jax.lax.rsqrt(p["var"] + eps)              # (OCb,)
        w_s = (wgt * scale[:, None, None, None]).astype(jnp.float32)    # BN scale folded in
        # (OCb, C, kH, W) -> (OCb, kH, C*W): per-tap layout matches the slab's (C, W).
        w_tap = jnp.transpose(w_s, (0, 2, 1, 3)).reshape(ocb, kh, cw)
        w_win = jnp.zeros((ocb, win, cwp), jnp.float32)
        w_win = w_win.at[:, off - win_start:off - win_start + kh, :cw].set(w_tap)
        w_rows.append(w_win.reshape(ocb, K))
        shifts.append(p["beta"] + (p["bias"] - p["mean"]) * scale)
    w_all = jnp.concatenate(w_rows, axis=0).astype(op_dtype)             # (OC_total, K)
    shift_all = jnp.concatenate(shifts)[:, None].astype(jnp.float32)     # (OC_total, 1)

    @jax.jit
    def forward(x):
        N, Cx, H, Wx = x.shape
        assert (Cx, Wx) == (C, W), (x.shape, C, W)
        Ho = H + ho_off
        ho_pad = _round_up(Ho, 8)       # sublane-align rows; garbage cols sliced off below
        hs = win - 1 + ho_pad           # slab rows the kernel reads
        tb = _pick_batch_block(N, ho_pad)
        nb = N // tb

        # The ONLY activation tensor written to / read from HBM is this zero-padded
        # slab (N, Hs, CWp); the window duplication happens in VMEM inside the kernel.
        top = max_pad - win_start
        bottom = hs - top - H
        assert bottom >= 0
        x_pad = jnp.pad(x, ((0, 0), (0, 0), (top, bottom), (0, 0)))
        slab = jnp.transpose(x_pad, (0, 2, 1, 3)).reshape(N, hs, cw)
        if cwp > cw:
            slab = jnp.pad(slab, ((0, 0), (0, 0), (0, cwp - cw)))
        slab = slab.astype(op_dtype)

        out = pl.pallas_call(
            functools.partial(_fused_inception_kernel,
                              win=win, ho_pad=ho_pad, precision=mm_precision),
            out_shape=jax.ShapeDtypeStruct((nb, oc_total, tb * ho_pad), out_dtype),
            # One step per TB-sized batch block, "parallel" so v7x's two TensorCores
            # can split the blocks when nb > 1; at these shapes nb == 1 (single step,
            # so no per-step overhead is paid on any generation).
            grid=(nb,),
            in_specs=[
                pl.BlockSpec((tb, hs, cwp), lambda b: (b, 0, 0)),
                # Grid-constant operands (block index independent of b).  For multi-step
                # grids with large OC_total*K, add pipeline_mode=pl.Buffered(1) here to
                # avoid a wasted second VMEM copy of the resident weights.
                pl.BlockSpec((oc_total, K), lambda b: (0, 0)),
                pl.BlockSpec((oc_total, 1), lambda b: (0, 0)),
            ],
            out_specs=pl.BlockSpec((1, oc_total, tb * ho_pad), lambda b: (b, 0, 0)),
            compiler_params=pltpu.CompilerParams(
                dimension_semantics=("parallel",),
                # Footprint here is < 1 MiB; 32 MiB stays inside every generation's
                # scoped default (v7x physical VMEM is only 64 MiB).  If shapes are
                # scaled up, shrink tb / add an inner "arbitrary" K-chunk axis with an
                # f32 accumulator rather than raising this.
                vmem_limit_bytes=32 * 1024 * 1024,
            ),
        )(slab, w_all, shift_all)

        # (nb, OC, tb*Ho_pad) -> NCHW (N, OC, Ho, 1); tiny tensor, XLA does the transpose.
        out = out.reshape(nb, oc_total, tb, ho_pad)[..., :Ho]
        out = out.transpose(0, 2, 1, 3).reshape(N, oc_total, Ho)
        return out[..., None]

    return forward


def init_inception_params(key, in_channel, sentence_length, filter_width,
                          filter_height, filter_channel):
    """Deterministic synthetic parameters, shapes as in InceptionModule.__init__."""
    fc3 = filter_channel // 3
    oc1 = fc3 + filter_channel - 3 * fc3
    branch_cfg = [
        # (kernel height along sentence axis, out_channels, padding)
        (filter_width, oc1, filter_width - 1),
        (filter_width + 4, fc3, filter_width + 1),
        (sentence_length, fc3, (sentence_length + filter_width - 2) // 2),
    ]
    params = []
    for i, (kH, oc, pad) in enumerate(branch_cfg):
        ks = jax.random.split(jax.random.fold_in(key, i), 6)
        params.append(dict(
            weight=0.1 * jax.random.normal(ks[0], (oc, in_channel, kH, filter_height), jnp.float32),
            bias=0.05 * jax.random.normal(ks[1], (oc,), jnp.float32),
            gamma=1.0 + 0.1 * jax.random.normal(ks[2], (oc,), jnp.float32),
            beta=0.05 * jax.random.normal(ks[3], (oc,), jnp.float32),
            mean=0.05 * jax.random.normal(ks[4], (oc,), jnp.float32),
            var=1.0 + 0.1 * jax.random.uniform(ks[5], (oc,), jnp.float32),
            pad=pad,
        ))
    return params


# --- pure-JAX reference (correctness check only) ---
def _reference_branch(x, p, eps=1e-5):
    out = jax.lax.conv_general_dilated(
        x, p["weight"], window_strides=(1, 1),
        padding=[(p["pad"], p["pad"]), (0, 0)],
        dimension_numbers=("NCHW", "OIHW", "NCHW"),
        precision=jax.lax.Precision.HIGHEST)
    out = out + p["bias"][None, :, None, None]
    out = (out - p["mean"][None, :, None, None]) * jax.lax.rsqrt(
        p["var"][None, :, None, None] + eps)
    out = out * p["gamma"][None, :, None, None] + p["beta"][None, :, None, None]
    return jnp.tanh(out)


if __name__ == "__main__":
    key = jax.random.PRNGKey(0)

    # x is NCHW = (batch, in_channel, sentence_length, filter_height)
    N, in_channel = 2, 4
    sentence_length, filter_width, filter_height, filter_channel = 8, 4, 16, 10

    x = jax.random.normal(jax.random.fold_in(key, 100),
                          (N, in_channel, sentence_length, filter_height),
                          jnp.float32)
    params = init_inception_params(key, in_channel, sentence_length,
                                   filter_width, filter_height, filter_channel)

    ref = jnp.concatenate([_reference_branch(x, p) for p in params], axis=1)

    # f32 operands; HIGHEST precision requested only for this tight-tolerance check.
    fwd = make_inception_forward(params, in_channel, filter_height,
                                 precision=jax.lax.Precision.HIGHEST)
    out = jax.block_until_ready(fwd(x))
    assert out.shape == ref.shape, (out.shape, ref.shape)
    np.testing.assert_allclose(np.asarray(out), np.asarray(ref),
                               atol=1e-4, rtol=1e-4)

    # bf16 operands + bf16 output (single MXU pass, half writeback); looser tolerance.
    fwd_bf16 = make_inception_forward(params, in_channel, filter_height, use_bf16=True)
    out_bf16 = jax.block_until_ready(fwd_bf16(x))
    np.testing.assert_allclose(np.asarray(out_bf16.astype(jnp.float32)), np.asarray(ref),
                               atol=5e-2, rtol=5e-2)

    print("KERNEL_OK")
</pallas_src>

<mosaic_0001>
module attributes {stable_mosaic.version = 11 : i64} {
  func.func @_fused_inception_kernel(%arg0: i32, %arg1: memref<2x23x128xf32, #tpu.memory_space<vmem>>, %arg2: memref<10x1024xf32, #tpu.memory_space<vmem>>, %arg3: memref<10x1xf32, #tpu.memory_space<vmem>>, %arg4: memref<1x10x32xf32, #tpu.memory_space<vmem>>) attributes {dimension_semantics = [#tpu.dimension_semantics<parallel>], iteration_bounds = array<i64: 1>, scalar_prefetch = 0 : i64, scratch_operands = 0 : i64, tpu.core_type = #tpu.core_type<tc>, window_params = [{transform_indices = @transform_0, window_bounds = array<i64: 2, 23, 128>}, {pipeline_mode = #tpu.pipeline_mode<synchronous>, transform_indices = @transform_1, window_bounds = array<i64: 10, 1024>}, {pipeline_mode = #tpu.pipeline_mode<synchronous>, transform_indices = @transform_2, window_bounds = array<i64: 10, 1>}, {transform_indices = @transform_3, window_bounds = array<i64: 1, 10, 32>}]} {
    %c0 = arith.constant 0 : index
    %c0_0 = arith.constant 0 : index
    %c0_1 = arith.constant 0 : index
    %0 = vector.load %arg1[%c0, %c0_0, %c0_1] : memref<2x23x128xf32, #tpu.memory_space<vmem>>, vector<2x23x128xf32>
    %1 = vector.extract_strided_slice %0 {offsets = [0, 0, 0], sizes = [2, 16, 128], strides = [1, 1, 1]} : vector<2x23x128xf32> to vector<2x16x128xf32>
    %2 = vector.extract_strided_slice %0 {offsets = [0, 1, 0], sizes = [2, 16, 128], strides = [1, 1, 1]} : vector<2x23x128xf32> to vector<2x16x128xf32>
    %3 = vector.extract_strided_slice %0 {offsets = [0, 2, 0], sizes = [2, 16, 128], strides = [1, 1, 1]} : vector<2x23x128xf32> to vector<2x16x128xf32>
    %4 = vector.extract_strided_slice %0 {offsets = [0, 3, 0], sizes = [2, 16, 128], strides = [1, 1, 1]} : vector<2x23x128xf32> to vector<2x16x128xf32>
    %5 = vector.extract_strided_slice %0 {offsets = [0, 4, 0], sizes = [2, 16, 128], strides = [1, 1, 1]} : vector<2x23x128xf32> to vector<2x16x128xf32>
    %6 = vector.extract_strided_slice %0 {offsets = [0, 5, 0], sizes = [2, 16, 128], strides = [1, 1, 1]} : vector<2x23x128xf32> to vector<2x16x128xf32>
    %7 = vector.extract_strided_slice %0 {offsets = [0, 6, 0], sizes = [2, 16, 128], strides = [1, 1, 1]} : vector<2x23x128xf32> to vector<2x16x128xf32>
    %8 = vector.extract_strided_slice %0 {offsets = [0, 7, 0], sizes = [2, 16, 128], strides = [1, 1, 1]} : vector<2x23x128xf32> to vector<2x16x128xf32>
    %9 = tpu.concatenate %1, %2, %3, %4, %5, %6, %7, %8 in 2 : vector<2x16x128xf32>, vector<2x16x128xf32>, vector<2x16x128xf32>, vector<2x16x128xf32>, vector<2x16x128xf32>, vector<2x16x128xf32>, vector<2x16x128xf32>, vector<2x16x128xf32> -> vector<2x16x1024xf32>
    %10 = vector.shape_cast %9 : vector<2x16x1024xf32> to vector<32x1024xf32>
    %c0_2 = arith.constant 0 : index
    %c0_3 = arith.constant 0 : index
    %11 = vector.load %arg2[%c0_2, %c0_3] : memref<10x1024xf32, #tpu.memory_space<vmem>>, vector<10x1024xf32>
    %cst = arith.constant dense<0.000000e+00> : vector<10x32xf32>
    %12 = tpu.matmul %11, %10, %cst {dimension_numbers = #tpu.dot_dimension_numbers<[1], [1], [0], [0], [0, 0, 1, 0], [], []>, precision = #tpu.contract_precision<fp32>} : vector<10x1024xf32>, vector<32x1024xf32>, vector<10x32xf32> -> vector<10x32xf32>
    %c0_4 = arith.constant 0 : index
    %c0_5 = arith.constant 0 : index
    %13 = vector.load %arg3[%c0_4, %c0_5] : memref<10x1xf32, #tpu.memory_space<vmem>>, vector<10x1xf32>
    %14 = vector.broadcast %13 : vector<10x1xf32> to vector<10x32xf32>
    %15 = arith.addf %12, %14 : vector<10x32xf32>
    %16 = math.tanh %15 : vector<10x32xf32>
    %c0_6 = arith.constant 0 : index
    %c0_7 = arith.constant 0 : index
    %c0_8 = arith.constant 0 : index
    %17 = vector.load %arg4[%c0_6, %c0_7, %c0_8] : memref<1x10x32xf32, #tpu.memory_space<vmem>>, vector<1x10x32xf32>
    %18 = vector.shape_cast %17 : vector<1x10x32xf32> to vector<10x32xf32>
    %19 = vector.shape_cast %16 : vector<10x32xf32> to vector<1x10x32xf32>
    tpu.vector_store %arg4[%c0_6, %c0_7, %c0_8], %19 {strides = array<i32>} : memref<1x10x32xf32, #tpu.memory_space<vmem>>, vector<1x10x32xf32>,
    return
  }
  func.func @transform_0(%arg0: i32) -> (i32, i32, i32) {
    %c0_i32 = arith.constant 0 : i32
    %c0_i32_0 = arith.constant 0 : i32
    %c0_i32_1 = arith.constant 0 : i32
    return %arg0, %c0_i32, %c0_i32_0 : i32, i32, i32
  }
  func.func @transform_1(%arg0: i32) -> (i32, i32) {
    %c0_i32 = arith.constant 0 : i32
    %c0_i32_0 = arith.constant 0 : i32
    %c0_i32_1 = arith.constant 0 : i32
    return %c0_i32, %c0_i32_0 : i32, i32
  }
  func.func @transform_2(%arg0: i32) -> (i32, i32) {
    %c0_i32 = arith.constant 0 : i32
    %c0_i32_0 = arith.constant 0 : i32
    %c0_i32_1 = arith.constant 0 : i32
    return %c0_i32, %c0_i32_0 : i32, i32
  }
  func.func @transform_3(%arg0: i32) -> (i32, i32, i32) {
    %c0_i32 = arith.constant 0 : i32
    %c0_i32_0 = arith.constant 0 : i32
    %c0_i32_1 = arith.constant 0 : i32
    return %arg0, %c0_i32, %c0_i32_0 : i32, i32, i32
  }
}

</mosaic_0001>

<llo_original>
// kernel: forward.1
$region0: #{forward.1}
  #allocation0 [shape = 'u32[]', space=smem, size = 0x4, offset = 0x4, fixed_abs, tag = 'smem constant byte address 0x4 - core index']
  #allocation1 [shape = 'u32[72,128]{1,0:T(1,128)}', space=vmem, size = 0x9000, scoped, tag = 'internal scratch']
  %s0 = inlined_call_operand.vmem [shape: f32[2,23,128], index: 0, kind: input, shape index: {}]
  %s1 = inlined_call_operand.vmem [shape: f32[10,1024], index: 1, kind: input, shape index: {}]
  %s2 = inlined_call_operand.vmem [shape: f32[10,1], index: 2, kind: input, shape index: {}]
  %s3 = inlined_call_operand.vmem [shape: f32[1,10,32], index: 3, kind: output, shape index: {}]
  %s4 = sld [smem:[#allocation0]]
  $region22: #{forward.1} parent=0
    _
  %s6 = ssub.s32 1, %s4
  %s7 = scalar_select 0, %s6, %s4
  // Predicated region
  $region2: #{forward.1} parent=0 // pred_check
    _
  $region3: #{forward.1} parent=0 // pred_check_branch
    %9 = sbr.rel (0) target = $region5
  $region4: #{forward.1} parent=0 // pred_region
    _
  $region5: #{forward.1} parent=0 // pred_fallthru
    _
  // Predicated region
  $region6: #{forward.1} parent=0 // pred_check
    _
  $region7: #{forward.1} parent=0 // pred_check_branch
    %11 = sbr.rel (0) target = $region9
  $region8: #{forward.1} parent=0 // pred_region
    _
  $region9: #{forward.1} parent=0 // pred_fallthru
    _
  // Predicated region
  $region10: #{forward.1} parent=0 // pred_check
    _
  $region11: #{forward.1} parent=0 // pred_check_branch
    %13 = sbr.rel (0) target = $region13
  $region12: #{forward.1} parent=0 // pred_region
    _
  $region13: #{forward.1} parent=0 // pred_fallthru
    _
  %v14 = vld [vmem:[%s0] sm:$0xff]
  %v15 = vld [vmem:[%s0 + $0x8] sm:$0xff]
  %v16 = vld [vmem:[%s0 + $0x10] sm:$0x7f]
  %v17 = vld [vmem:[%s0 + $0x18] sm:$0xff]
  %v18 = vld [vmem:[%s0 + $0x20] sm:$0xff]
  %v19 = vld [vmem:[%s0 + $0x28] sm:$0x7f]
  %vm26 = vcmask 1046528
  %v27 = vrot.slane %v14, 1
  %v28 = vrot.slane %v15, 1
  %v29 = vsel %vm26, %v27, %v28
  %v30 = vrot.slane %v16, 1
  %v31 = vsel %vm26, %v28, %v30
  %v32 = vrot.slane %v17, 1
  %v33 = vrot.slane %v18, 1
  %v34 = vsel %vm26, %v32, %v33
  %v35 = vrot.slane %v19, 1
  %v36 = vsel %vm26, %v33, %v35
  %vm41 = vcmask 1045504
  %v42 = vrot.slane %v14, 2
  %v43 = vrot.slane %v15, 2
  %v44 = vsel %vm41, %v42, %v43
  %v45 = vrot.slane %v16, 2
  %v46 = vsel %vm41, %v43, %v45
  %v47 = vrot.slane %v17, 2
  %v48 = vrot.slane %v18, 2
  %v49 = vsel %vm41, %v47, %v48
  %v50 = vrot.slane %v19, 2
  %v51 = vsel %vm41, %v48, %v50
  %vm56 = vcmask 1044480
  %v57 = vrot.slane %v14, 3
  %v58 = vrot.slane %v15, 3
  %v59 = vsel %vm56, %v57, %v58
  %v60 = vrot.slane %v16, 3
  %v61 = vsel %vm56, %v58, %v60
  %v62 = vrot.slane %v17, 3
  %v63 = vrot.slane %v18, 3
  %v64 = vsel %vm56, %v62, %v63
  %v65 = vrot.slane %v19, 3
  %v66 = vsel %vm56, %v63, %v65
  %vm71 = vcmask 1043456
  %v72 = vrot.slane %v14, 4
  %v73 = vrot.slane %v15, 4
  %v74 = vsel %vm71, %v72, %v73
  %v75 = vrot.slane %v16, 4
  %v76 = vsel %vm71, %v73, %v75
  %v77 = vrot.slane %v17, 4
  %v78 = vrot.slane %v18, 4
  %v79 = vsel %vm71, %v77, %v78
  %v80 = vrot.slane %v19, 4
  %v81 = vsel %vm71, %v78, %v80
  %vm86 = vcmask 1042432
  %v87 = vrot.slane %v14, 5
  %v88 = vrot.slane %v15, 5
  %v89 = vsel %vm86, %v87, %v88
  %v90 = vrot.slane %v16, 5
  %v91 = vsel %vm86, %v88, %v90
  %v92 = vrot.slane %v17, 5
  %v93 = vrot.slane %v18, 5
  %v94 = vsel %vm86, %v92, %v93
  %v95 = vrot.slane %v19, 5
  %v96 = vsel %vm86, %v93, %v95
  %vm101 = vcmask 1041408
  %v102 = vrot.slane %v14, 6
  %v103 = vrot.slane %v15, 6
  %v104 = vsel %vm101, %v102, %v103
  %v105 = vrot.slane %v16, 6
  %v106 = vsel %vm101, %v103, %v105
  %v107 = vrot.slane %v17, 6
  %v108 = vrot.slane %v18, 6
  %v109 = vsel %vm101, %v107, %v108
  %v110 = vrot.slane %v19, 6
  %v111 = vsel %vm101, %v108, %v110
  %vm116 = vcmask 1040384
  %v117 = vrot.slane %v14, 7
  %v118 = vrot.slane %v15, 7
  %v119 = vsel %vm116, %v117, %v118
  %v120 = vrot.slane %v16, 7
  %v121 = vsel %vm116, %v118, %v120
  %v122 = vrot.slane %v17, 7
  %v123 = vrot.slane %v18, 7
  %v124 = vsel %vm116, %v122, %v123
  %v125 = vrot.slane %v19, 7
  %v126 = vsel %vm116, %v123, %v125
  %v131 = vld [vmem:[%s1] sm:$0xff]
  %v132 = vld [vmem:[%s1 + $0x8] sm:$0xff]
  %v133 = vld [vmem:[%s1 + $0x10] sm:$0xff]
  %v134 = vld [vmem:[%s1 + $0x18] sm:$0xff]
  %v135 = vld [vmem:[%s1 + $0x20] sm:$0xff]
  %v136 = vld [vmem:[%s1 + $0x28] sm:$0xff]
  %v137 = vld [vmem:[%s1 + $0x30] sm:$0xff]
  %v138 = vld [vmem:[%s1 + $0x38] sm:$0xff]
  %v139 = vld [vmem:[%s1 + $0x40] sm:$0x3]
  %v140 = vld [vmem:[%s1 + $0x48] sm:$0x3]
  %v141 = vld [vmem:[%s1 + $0x50] sm:$0x3]
  %v142 = vld [vmem:[%s1 + $0x58] sm:$0x3]
  %v143 = vld [vmem:[%s1 + $0x60] sm:$0x3]
  %v144 = vld [vmem:[%s1 + $0x68] sm:$0x3]
  %v145 = vld [vmem:[%s1 + $0x70] sm:$0x3]
  %v146 = vld [vmem:[%s1 + $0x78] sm:$0x3]
  %v147 = vld [vmem:[%s2] sm:$0xff]
  %v148 = vld [vmem:[%s2 + $0x8] sm:$0x3]
  %150 = vset.pattern.permute.xlu0 0
  %151 = vperm.xlu0 %150, %v147
  %v152 = vpop.permute.xlu0 %151
  %155 = vset.pattern.permute.xlu0 0
  %156 = vperm.xlu0 %155, %v148
  %v157 = vpop.permute.xlu0 %156
  %159 = vmatpush.xpose.msra.mxu0 0.0
  %160 = vmatpush.xpose.msra.mxu0 0.0
  %161 = vmatpush.xpose.msra.mxu0 0.0
  %162 = vmatpush.xpose.msra.mxu0 0.0
  %163 = vmatpush.xpose.msra.mxu0 0.0
  %164 = vmatpush.xpose.msra.mxu0 0.0
  %165 = vmatpush.xpose.msra.mxu0 0.0
  %166 = vmatpush.xpose.msra.mxu0 0.0
  %167 = vmatpush.xpose.msra.mxu0 0.0
  %168 = vmatpush.xpose.msra.mxu0 0.0
  %169 = vmatpush.xpose.msra.mxu0 0.0
  %170 = vmatpush.xpose.msra.mxu0 0.0
  %v171 = vand.u32 %v18, 4294901760
  %172 = vmatpush.xpose.msra.mxu0 %v171
  %v173 = vand.u32 %v17, 4294901760
  %174 = vmatpush.xpose.msra.mxu0 %v173
  %v175 = vand.u32 %v15, 4294901760
  %176 = vmatpush.xpose.msra.mxu0 %v175
  %v177 = vand.u32 %v14, 4294901760
  %178 = vmatpush.xpose.msra.mxu0 %v177
  %v179 = vand.u32 %v131, 4294901760
  %v180 = vsub.f32 %v131, %v179
  %v181 = vand.u32 %v180, 4294901760
  %v182 = vsub.f32 %v180, %v181
  %v183 = vand.u32 %v182, 4294901760
  %184 = vmatmul.f32.gmra.mxu0 %v183
  %v185 = vpop.f32.mrf.mxu0
  %v186 = vadd.f32 %v152, %v185
  %v187 = vand.u32 %v139, 4294901760
  %v188 = vsub.f32 %v139, %v187
  %v189 = vand.u32 %v188, 4294901760
  %v190 = vsub.f32 %v188, %v189
  %v191 = vand.u32 %v190, 4294901760
  %192 = vmatmul.f32.gmra.mxu0 %v191
  %v193 = vpop.f32.mrf.mxu0
  %v194 = vadd.f32 %v157, %v193
  %195 = vdwg.mxu0
  %196 = vmatpush.xpose.msra.mxu0 0.0
  %197 = vmatpush.xpose.msra.mxu0 0.0
  %198 = vmatpush.xpose.msra.mxu0 0.0
  %199 = vmatpush.xpose.msra.mxu0 0.0
  %200 = vmatpush.xpose.msra.mxu0 0.0
  %201 = vmatpush.xpose.msra.mxu0 0.0
  %202 = vmatpush.xpose.msra.mxu0 0.0
  %203 = vmatpush.xpose.msra.mxu0 0.0
  %204 = vmatpush.xpose.msra.mxu0 0.0
  %205 = vmatpush.xpose.msra.mxu0 0.0
  %206 = vmatpush.xpose.msra.mxu0 0.0
  %207 = vmatpush.xpose.msra.mxu0 0.0
  %v208 = vand.u32 %v18, 4294901760
  %v209 = vsub.f32 %v18, %v208
  %v210 = vand.u32 %v209, 4294901760
  %v211 = vsub.f32 %v209, %v210
  %v212 = vand.u32 %v211, 4294901760
  %213 = vmatpush.xpose.msra.mxu0 %v212
  %v214 = vand.u32 %v17, 4294901760
  %v215 = vsub.f32 %v17, %v214
  %v216 = vand.u32 %v215, 4294901760
  %v217 = vsub.f32 %v215, %v216
  %v218 = vand.u32 %v217, 4294901760
  %219 = vmatpush.xpose.msra.mxu0 %v218
  %v220 = vand.u32 %v15, 4294901760
  %v221 = vsub.f32 %v15, %v220
  %v222 = vand.u32 %v221, 4294901760
  %v223 = vsub.f32 %v221, %v222
  %v224 = vand.u32 %v223, 4294901760
  %225 = vmatpush.xpose.msra.mxu0 %v224
  %v226 = vand.u32 %v14, 4294901760
  %v227 = vsub.f32 %v14, %v226
  %v228 = vand.u32 %v227, 4294901760
  %v229 = vsub.f32 %v227, %v228
  %v230 = vand.u32 %v229, 4294901760
  %231 = vmatpush.xpose.msra.mxu0 %v230
  %v232 = vand.u32 %v131, 4294901760
  %233 = vmatmul.f32.gmra.mxu0 %v232
  %v234 = vpop.f32.mrf.mxu0
  %v235 = vadd.f32 %v186, %v234
  %v236 = vand.u32 %v139, 4294901760
  %237 = vmatmul.f32.gmra.mxu0 %v236
  %v238 = vpop.f32.mrf.mxu0
  %v239 = vadd.f32 %v194, %v238
  %240 = vdwg.mxu0
  %241 = vmatpush.xpose.msra.mxu0 0.0
  %242 = vmatpush.xpose.msra.mxu0 0.0
  %243 = vmatpush.xpose.msra.mxu0 0.0
  %244 = vmatpush.xpose.msra.mxu0 0.0
  %245 = vmatpush.xpose.msra.mxu0 0.0
  %246 = vmatpush.xpose.msra.mxu0 0.0
  %247 = vmatpush.xpose.msra.mxu0 0.0
  %248 = vmatpush.xpose.msra.mxu0 0.0
  %249 = vmatpush.xpose.msra.mxu0 0.0
  %250 = vmatpush.xpose.msra.mxu0 0.0
  %251 = vmatpush.xpose.msra.mxu0 0.0
  %252 = vmatpush.xpose.msra.mxu0 0.0
  %v253 = vand.u32 %v18, 4294901760
  %v254 = vsub.f32 %v18, %v253
  %255 = vmatpush.xpose.msra.mxu0 %v254
  %v256 = vand.u32 %v17, 4294901760
  %v257 = vsub.f32 %v17, %v256
  %258 = vmatpush.xpose.msra.mxu0 %v257
  %v259 = vand.u32 %v15, 4294901760
  %v260 = vsub.f32 %v15, %v259
  %261 = vmatpush.xpose.msra.mxu0 %v260
  %v262 = vand.u32 %v14, 4294901760
  %v263 = vsub.f32 %v14, %v262
  %264 = vmatpush.xpose.msra.mxu0 %v263
  %v265 = vand.u32 %v131, 4294901760
  %v266 = vsub.f32 %v131, %v265
  %267 = vmatmul.f32.gmra.mxu0 %v266
  %v268 = vpop.f32.mrf.mxu0
  %v269 = vadd.f32 %v235, %v268
  %v270 = vand.u32 %v139, 4294901760
  %v271 = vsub.f32 %v139, %v270
  %272 = vmatmul.f32.gmra.mxu0 %v271
  %v273 = vpop.f32.mrf.mxu0
  %v274 = vadd.f32 %v239, %v273
  %275 = vdwg.mxu0
  %276 = vmatpush.xpose.msra.mxu0 0.0
  %277 = vmatpush.xpose.msra.mxu0 0.0
  %278 = vmatpush.xpose.msra.mxu0 0.0
  %279 = vmatpush.xpose.msra.mxu0 0.0
  %280 = vmatpush.xpose.msra.mxu0 0.0
  %281 = vmatpush.xpose.msra.mxu0 0.0
  %282 = vmatpush.xpose.msra.mxu0 0.0
  %283 = vmatpush.xpose.msra.mxu0 0.0
  %284 = vmatpush.xpose.msra.mxu0 0.0
  %285 = vmatpush.xpose.msra.mxu0 0.0
  %286 = vmatpush.xpose.msra.mxu0 0.0
  %287 = vmatpush.xpose.msra.mxu0 0.0
  %v288 = vand.u32 %v18, 4294901760
  %289 = vmatpush.xpose.msra.mxu0 %v288
  %v290 = vand.u32 %v17, 4294901760
  %291 = vmatpush.xpose.msra.mxu0 %v290
  %v292 = vand.u32 %v15, 4294901760
  %293 = vmatpush.xpose.msra.mxu0 %v292
  %v294 = vand.u32 %v14, 4294901760
  %295 = vmatpush.xpose.msra.mxu0 %v294
  %v296 = vand.u32 %v131, 4294901760
  %v297 = vsub.f32 %v131, %v296
  %v298 = vand.u32 %v297, 4294901760
  %299 = vmatmul.f32.gmra.mxu0 %v298
  %v300 = vpop.f32.mrf.mxu0
  %v301 = vadd.f32 %v269, %v300
  %v302 = vand.u32 %v139, 4294901760
  %v303 = vsub.f32 %v139, %v302
  %v304 = vand.u32 %v303, 4294901760
  %305 = vmatmul.f32.gmra.mxu0 %v304
  %v306 = vpop.f32.mrf.mxu0
  %v307 = vadd.f32 %v274, %v306
  %308 = vdwg.mxu0
  %309 = vmatpush.xpose.msra.mxu0 0.0
  %310 = vmatpush.xpose.msra.mxu0 0.0
  %311 = vmatpush.xpose.msra.mxu0 0.0
  %312 = vmatpush.xpose.msra.mxu0 0.0
  %313 = vmatpush.xpose.msra.mxu0 0.0
  %314 = vmatpush.xpose.msra.mxu0 0.0
  %315 = vmatpush.xpose.msra.mxu0 0.0
  %316 = vmatpush.xpose.msra.mxu0 0.0
  %317 = vmatpush.xpose.msra.mxu0 0.0
  %318 = vmatpush.xpose.msra.mxu0 0.0
  %319 = vmatpush.xpose.msra.mxu0 0.0
  %320 = vmatpush.xpose.msra.mxu0 0.0
  %v321 = vand.u32 %v18, 4294901760
  %v322 = vsub.f32 %v18, %v321
  %v323 = vand.u32 %v322, 4294901760
  %324 = vmatpush.xpose.msra.mxu0 %v323
  %v325 = vand.u32 %v17, 4294901760
  %v326 = vsub.f32 %v17, %v325
  %v327 = vand.u32 %v326, 4294901760
  %328 = vmatpush.xpose.msra.mxu0 %v327
  %v329 = vand.u32 %v15, 4294901760
  %v330 = vsub.f32 %v15, %v329
  %v331 = vand.u32 %v330, 4294901760
  %332 = vmatpush.xpose.msra.mxu0 %v331
  %v333 = vand.u32 %v14, 4294901760
  %v334 = vsub.f32 %v14, %v333
  %v335 = vand.u32 %v334, 4294901760
  %336 = vmatpush.xpose.msra.mxu0 %v335
  %v337 = vand.u32 %v131, 4294901760
  %338 = vmatmul.f32.gmra.mxu0 %v337
  %v339 = vpop.f32.mrf.mxu0
  %v340 = vadd.f32 %v301, %v339
  %v341 = vand.u32 %v139, 4294901760
  %342 = vmatmul.f32.gmra.mxu0 %v341
  %v343 = vpop.f32.mrf.mxu0
  %v344 = vadd.f32 %v307, %v343
  %345 = vdwg.mxu0
  %346 = vmatpush.xpose.msra.mxu0 0.0
  %347 = vmatpush.xpose.msra.mxu0 0.0
  %348 = vmatpush.xpose.msra.mxu0 0.0
  %349 = vmatpush.xpose.msra.mxu0 0.0
  %350 = vmatpush.xpose.msra.mxu0 0.0
  %351 = vmatpush.xpose.msra.mxu0 0.0
  %352 = vmatpush.xpose.msra.mxu0 0.0
  %353 = vmatpush.xpose.msra.mxu0 0.0
  %354 = vmatpush.xpose.msra.mxu0 0.0
  %355 = vmatpush.xpose.msra.mxu0 0.0
  %356 = vmatpush.xpose.msra.mxu0 0.0
  %357 = vmatpush.xpose.msra.mxu0 0.0
  %v358 = vand.u32 %v18, 4294901760
  %359 = vmatpush.xpose.msra.mxu0 %v358
  %v360 = vand.u32 %v17, 4294901760
  %361 = vmatpush.xpose.msra.mxu0 %v360
  %v362 = vand.u32 %v15, 4294901760
  %363 = vmatpush.xpose.msra.mxu0 %v362
  %v364 = vand.u32 %v14, 4294901760
  %365 = vmatpush.xpose.msra.mxu0 %v364
  %v366 = vand.u32 %v131, 4294901760
  %367 = vmatmul.f32.gmra.mxu0 %v366
  %v368 = vpop.f32.mrf.mxu0
  %v369 = vadd.f32 %v340, %v368
  %v370 = vand.u32 %v139, 4294901760
  %371 = vmatmul.f32.gmra.mxu0 %v370
  %v372 = vpop.f32.mrf.mxu0
  %v373 = vadd.f32 %v344, %v372
  %374 = vdwg.mxu0
  %375 = vmatpush.xpose.msra.mxu0 0.0
  %376 = vmatpush.xpose.msra.mxu0 0.0
  %377 = vmatpush.xpose.msra.mxu0 0.0
  %378 = vmatpush.xpose.msra.mxu0 0.0
  %379 = vmatpush.xpose.msra.mxu0 0.0
  %380 = vmatpush.xpose.msra.mxu0 0.0
  %381 = vmatpush.xpose.msra.mxu0 0.0
  %382 = vmatpush.xpose.msra.mxu0 0.0
  %383 = vmatpush.xpose.msra.mxu0 0.0
  %384 = vmatpush.xpose.msra.mxu0 0.0
  %385 = vmatpush.xpose.msra.mxu0 0.0
  %386 = vmatpush.xpose.msra.mxu0 0.0
  %v387 = vand.u32 %v36, 4294901760
  %388 = vmatpush.xpose.msra.mxu0 %v387
  %v389 = vand.u32 %v34, 4294901760
  %390 = vmatpush.xpose.msra.mxu0 %v389
  %v391 = vand.u32 %v31, 4294901760
  %392 = vmatpush.xpose.msra.mxu0 %v391
  %v393 = vand.u32 %v29, 4294901760
  %394 = vmatpush.xpose.msra.mxu0 %v393
  %v395 = vand.u32 %v132, 4294901760
  %v396 = vsub.f32 %v132, %v395
  %v397 = vand.u32 %v396, 4294901760
  %v398 = vsub.f32 %v396, %v397
  %v399 = vand.u32 %v398, 4294901760
  %400 = vmatmul.f32.gmra.mxu0 %v399
  %v401 = vpop.f32.mrf.mxu0
  %v402 = vadd.f32 %v369, %v401
  %v403 = vand.u32 %v140, 4294901760
  %v404 = vsub.f32 %v140, %v403
  %v405 = vand.u32 %v404, 4294901760
  %v406 = vsub.f32 %v404, %v405
  %v407 = vand.u32 %v406, 4294901760
  %408 = vmatmul.f32.gmra.mxu0 %v407
  %v409 = vpop.f32.mrf.mxu0
  %v410 = vadd.f32 %v373, %v409
  %411 = vdwg.mxu0
  %412 = vmatpush.xpose.msra.mxu0 0.0
  %413 = vmatpush.xpose.msra.mxu0 0.0
  %414 = vmatpush.xpose.msra.mxu0 0.0
  %415 = vmatpush.xpose.msra.mxu0 0.0
  %416 = vmatpush.xpose.msra.mxu0 0.0
  %417 = vmatpush.xpose.msra.mxu0 0.0
  %418 = vmatpush.xpose.msra.mxu0 0.0
  %419 = vmatpush.xpose.msra.mxu0 0.0
  %420 = vmatpush.xpose.msra.mxu0 0.0
  %421 = vmatpush.xpose.msra.mxu0 0.0
  %422 = vmatpush.xpose.msra.mxu0 0.0
  %423 = vmatpush.xpose.msra.mxu0 0.0
  %v424 = vand.u32 %v36, 4294901760
  %v425 = vsub.f32 %v36, %v424
  %v426 = vand.u32 %v425, 4294901760
  %v427 = vsub.f32 %v425, %v426
  %v428 = vand.u32 %v427, 4294901760
  %429 = vmatpush.xpose.msra.mxu0 %v428
  %v430 = vand.u32 %v34, 4294901760
  %v431 = vsub.f32 %v34, %v430
  %v432 = vand.u32 %v431, 4294901760
  %v433 = vsub.f32 %v431, %v432
  %v434 = vand.u32 %v433, 4294901760
  %435 = vmatpush.xpose.msra.mxu0 %v434
  %v436 = vand.u32 %v31, 4294901760
  %v437 = vsub.f32 %v31, %v436
  %v438 = vand.u32 %v437, 4294901760
  %v439 = vsub.f32 %v437, %v438
  %v440 = vand.u32 %v439, 4294901760
  %441 = vmatpush.xpose.msra.mxu0 %v440
  %v442 = vand.u32 %v29, 4294901760
  %v443 = vsub.f32 %v29, %v442
  %v444 = vand.u32 %v443, 4294901760
  %v445 = vsub.f32 %v443, %v444
  %v446 = vand.u32 %v445, 4294901760
  %447 = vmatpush.xpose.msra.mxu0 %v446
  %v448 = vand.u32 %v132, 4294901760
  %449 = vmatmul.f32.gmra.mxu0 %v448
  %v450 = vpop.f32.mrf.mxu0
  %v451 = vadd.f32 %v402, %v450
  %v452 = vand.u32 %v140, 4294901760
  %453 = vmatmul.f32.gmra.mxu0 %v452
  %v454 = vpop.f32.mrf.mxu0
  %v455 = vadd.f32 %v410, %v454
  %456 = vdwg.mxu0
  %457 = vmatpush.xpose.msra.mxu0 0.0
  %458 = vmatpush.xpose.msra.mxu0 0.0
  %459 = vmatpush.xpose.msra.mxu0 0.0
  %460 = vmatpush.xpose.msra.mxu0 0.0
  %461 = vmatpush.xpose.msra.mxu0 0.0
  %462 = vmatpush.xpose.msra.mxu0 0.0
  %463 = vmatpush.xpose.msra.mxu0 0.0
  %464 = vmatpush.xpose.msra.mxu0 0.0
  %465 = vmatpush.xpose.msra.mxu0 0.0
  %466 = vmatpush.xpose.msra.mxu0 0.0
  %467 = vmatpush.xpose.msra.mxu0 0.0
  %468 = vmatpush.xpose.msra.mxu0 0.0
  %v469 = vand.u32 %v36, 4294901760
  %v470 = vsub.f32 %v36, %v469
  %471 = vmatpush.xpose.msra.mxu0 %v470
  %v472 = vand.u32 %v34, 4294901760
  %v473 = vsub.f32 %v34, %v472
  %474 = vmatpush.xpose.msra.mxu0 %v473
  %v475 = vand.u32 %v31, 4294901760
  %v476 = vsub.f32 %v31, %v475
  %477 = vmatpush.xpose.msra.mxu0 %v476
  %v478 = vand.u32 %v29, 4294901760
  %v479 = vsub.f32 %v29, %v478
  %480 = vmatpush.xpose.msra.mxu0 %v479
  %v481 = vand.u32 %v132, 4294901760
  %v482 = vsub.f32 %v132, %v481
  %483 = vmatmul.f32.gmra.mxu0 %v482
  %v484 = vpop.f32.mrf.mxu0
  %v485 = vadd.f32 %v451, %v484
  %v486 = vand.u32 %v140, 4294901760
  %v487 = vsub.f32 %v140, %v486
  %488 = vmatmul.f32.gmra.mxu0 %v487
  %v489 = vpop.f32.mrf.mxu0
  %v490 = vadd.f32 %v455, %v489
  %491 = vdwg.mxu0
  %492 = vmatpush.xpose.msra.mxu0 0.0
  %493 = vmatpush.xpose.msra.mxu0 0.0
  %494 = vmatpush.xpose.msra.mxu0 0.0
  %495 = vmatpush.xpose.msra.mxu0 0.0
  %496 = vmatpush.xpose.msra.mxu0 0.0
  %497 = vmatpush.xpose.msra.mxu0 0.0
  %498 = vmatpush.xpose.msra.mxu0 0.0
  %499 = vmatpush.xpose.msra.mxu0 0.0
  %500 = vmatpush.xpose.msra.mxu0 0.0
  %501 = vmatpush.xpose.msra.mxu0 0.0
  %502 = vmatpush.xpose.msra.mxu0 0.0
  %503 = vmatpush.xpose.msra.mxu0 0.0
  %v504 = vand.u32 %v36, 4294901760
  %505 = vmatpush.xpose.msra.mxu0 %v504
  %v506 = vand.u32 %v34, 4294901760
  %507 = vmatpush.xpose.msra.mxu0 %v506
  %v508 = vand.u32 %v31, 4294901760
  %509 = vmatpush.xpose.msra.mxu0 %v508
  %v510 = vand.u32 %v29, 4294901760
  %511 = vmatpush.xpose.msra.mxu0 %v510
  %v512 = vand.u32 %v132, 4294901760
  %v513 = vsub.f32 %v132, %v512
  %v514 = vand.u32 %v513, 4294901760
  %515 = vmatmul.f32.gmra.mxu0 %v514
  %v516 = vpop.f32.mrf.mxu0
  %v517 = vadd.f32 %v485, %v516
  %v518 = vand.u32 %v140, 4294901760
  %v519 = vsub.f32 %v140, %v518
  %v520 = vand.u32 %v519, 4294901760
  %521 = vmatmul.f32.gmra.mxu0 %v520
  %v522 = vpop.f32.mrf.mxu0
  %v523 = vadd.f32 %v490, %v522
  %524 = vdwg.mxu0
  %525 = vmatpush.xpose.msra.mxu0 0.0
  %526 = vmatpush.xpose.msra.mxu0 0.0
  %527 = vmatpush.xpose.msra.mxu0 0.0
  %528 = vmatpush.xpose.msra.mxu0 0.0
  %529 = vmatpush.xpose.msra.mxu0 0.0
  %530 = vmatpush.xpose.msra.mxu0 0.0
  %531 = vmatpush.xpose.msra.mxu0 0.0
  %532 = vmatpush.xpose.msra.mxu0 0.0
  %533 = vmatpush.xpose.msra.mxu0 0.0
  %534 = vmatpush.xpose.msra.mxu0 0.0
  %535 = vmatpush.xpose.msra.mxu0 0.0
  %536 = vmatpush.xpose.msra.mxu0 0.0
  %v537 = vand.u32 %v36, 4294901760
  %v538 = vsub.f32 %v36, %v537
  %v539 = vand.u32 %v538, 4294901760
  %540 = vmatpush.xpose.msra.mxu0 %v539
  %v541 = vand.u32 %v34, 4294901760
  %v542 = vsub.f32 %v34, %v541
  %v543 = vand.u32 %v542, 4294901760
  %544 = vmatpush.xpose.msra.mxu0 %v543
  %v545 = vand.u32 %v31, 4294901760
  %v546 = vsub.f32 %v31, %v545
  %v547 = vand.u32 %v546, 4294901760
  %548 = vmatpush.xpose.msra.mxu0 %v547
  %v549 = vand.u32 %v29, 4294901760
  %v550 = vsub.f32 %v29, %v549
  %v551 = vand.u32 %v550, 4294901760
  %552 = vmatpush.xpose.msra.mxu0 %v551
  %v553 = vand.u32 %v132, 4294901760
  %554 = vmatmul.f32.gmra.mxu0 %v553
  %v555 = vpop.f32.mrf.mxu0
  %v556 = vadd.f32 %v517, %v555
  %v557 = vand.u32 %v140, 4294901760
  %558 = vmatmul.f32.gmra.mxu0 %v557
  %v559 = vpop.f32.mrf.mxu0
  %v560 = vadd.f32 %v523, %v559
  %561 = vdwg.mxu0
  %562 = vmatpush.xpose.msra.mxu0 0.0
  %563 = vmatpush.xpose.msra.mxu0 0.0
  %564 = vmatpush.xpose.msra.mxu0 0.0
  %565 = vmatpush.xpose.msra.mxu0 0.0
  %566 = vmatpush.xpose.msra.mxu0 0.0
  %567 = vmatpush.xpose.msra.mxu0 0.0
  %568 = vmatpush.xpose.msra.mxu0 0.0
  %569 = vmatpush.xpose.msra.mxu0 0.0
  %570 = vmatpush.xpose.msra.mxu0 0.0
  %571 = vmatpush.xpose.msra.mxu0 0.0
  %572 = vmatpush.xpose.msra.mxu0 0.0
  %573 = vmatpush.xpose.msra.mxu0 0.0
  %v574 = vand.u32 %v36, 4294901760
  %575 = vmatpush.xpose.msra.mxu0 %v574
  %v576 = vand.u32 %v34, 4294901760
  %577 = vmatpush.xpose.msra.mxu0 %v576
  %v578 = vand.u32 %v31, 4294901760
  %579 = vmatpush.xpose.msra.mxu0 %v578
  %v580 = vand.u32 %v29, 4294901760
  %581 = vmatpush.xpose.msra.mxu0 %v580
  %v582 = vand.u32 %v132, 4294901760
  %583 = vmatmul.f32.gmra.mxu0 %v582
  %v584 = vpop.f32.mrf.mxu0
  %v585 = vadd.f32 %v556, %v584
  %v586 = vand.u32 %v140, 4294901760
  %587 = vmatmul.f32.gmra.mxu0 %v586
  %v588 = vpop.f32.mrf.mxu0
  %v589 = vadd.f32 %v560, %v588
  %590 = vdwg.mxu0
  %591 = vmatpush.xpose.msra.mxu0 0.0
  %592 = vmatpush.xpose.msra.mxu0 0.0
  %593 = vmatpush.xpose.msra.mxu0 0.0
  %594 = vmatpush.xpose.msra.mxu0 0.0
  %595 = vmatpush.xpose.msra.mxu0 0.0
  %596 = vmatpush.xpose.msra.mxu0 0.0
  %597 = vmatpush.xpose.msra.mxu0 0.0
  %598 = vmatpush.xpose.msra.mxu0 0.0
  %599 = vmatpush.xpose.msra.mxu0 0.0
  %600 = vmatpush.xpose.msra.mxu0 0.0
  %601 = vmatpush.xpose.msra.mxu0 0.0
  %602 = vmatpush.xpose.msra.mxu0 0.0
  %v603 = vand.u32 %v51, 4294901760
  %604 = vmatpush.xpose.msra.mxu0 %v603
  %v605 = vand.u32 %v49, 4294901760
  %606 = vmatpush.xpose.msra.mxu0 %v605
  %v607 = vand.u32 %v46, 4294901760
  %608 = vmatpush.xpose.msra.mxu0 %v607
  %v609 = vand.u32 %v44, 4294901760
  %610 = vmatpush.xpose.msra.mxu0 %v609
  %v611 = vand.u32 %v133, 4294901760
  %v612 = vsub.f32 %v133, %v611
  %v613 = vand.u32 %v612, 4294901760
  %v614 = vsub.f32 %v612, %v613
  %v615 = vand.u32 %v614, 4294901760
  %616 = vmatmul.f32.gmra.mxu0 %v615
  %v617 = vpop.f32.mrf.mxu0
  %v618 = vadd.f32 %v585, %v617
  %v619 = vand.u32 %v141, 4294901760
  %v620 = vsub.f32 %v141, %v619
  %v621 = vand.u32 %v620, 4294901760
  %v622 = vsub.f32 %v620, %v621
  %v623 = vand.u32 %v622, 4294901760
  %624 = vmatmul.f32.gmra.mxu0 %v623
  %v625 = vpop.f32.mrf.mxu0
  %v626 = vadd.f32 %v589, %v625
  %627 = vdwg.mxu0
  %628 = vmatpush.xpose.msra.mxu0 0.0
  %629 = vmatpush.xpose.msra.mxu0 0.0
  %630 = vmatpush.xpose.msra.mxu0 0.0
  %631 = vmatpush.xpose.msra.mxu0 0.0
  %632 = vmatpush.xpose.msra.mxu0 0.0
  %633 = vmatpush.xpose.msra.mxu0 0.0
  %634 = vmatpush.xpose.msra.mxu0 0.0
  %635 = vmatpush.xpose.msra.mxu0 0.0
  %636 = vmatpush.xpose.msra.mxu0 0.0
  %637 = vmatpush.xpose.msra.mxu0 0.0
  %638 = vmatpush.xpose.msra.mxu0 0.0
  %639 = vmatpush.xpose.msra.mxu0 0.0
  %v640 = vand.u32 %v51, 4294901760
  %v641 = vsub.f32 %v51, %v640
  %v642 = vand.u32 %v641, 4294901760
  %v643 = vsub.f32 %v641, %v642
  %v644 = vand.u32 %v643, 4294901760
  %645 = vmatpush.xpose.msra.mxu0 %v644
  %v646 = vand.u32 %v49, 4294901760
  %v647 = vsub.f32 %v49, %v646
  %v648 = vand.u32 %v647, 4294901760
  %v649 = vsub.f32 %v647, %v648
  %v650 = vand.u32 %v649, 4294901760
  %651 = vmatpush.xpose.msra.mxu0 %v650
  %v652 = vand.u32 %v46, 4294901760
  %v653 = vsub.f32 %v46, %v652
  %v654 = vand.u32 %v653, 4294901760
  %v655 = vsub.f32 %v653, %v654
  %v656 = vand.u32 %v655, 4294901760
  %657 = vmatpush.xpose.msra.mxu0 %v656
  %v658 = vand.u32 %v44, 4294901760
  %v659 = vsub.f32 %v44, %v658
  %v660 = vand.u32 %v659, 4294901760
  %v661 = vsub.f32 %v659, %v660
  %v662 = vand.u32 %v661, 4294901760
  %663 = vmatpush.xpose.msra.mxu0 %v662
  %v664 = vand.u32 %v133, 4294901760
  %665 = vmatmul.f32.gmra.mxu0 %v664
  %v666 = vpop.f32.mrf.mxu0
  %v667 = vadd.f32 %v618, %v666
  %v668 = vand.u32 %v141, 4294901760
  %669 = vmatmul.f32.gmra.mxu0 %v668
  %v670 = vpop.f32.mrf.mxu0
  %v671 = vadd.f32 %v626, %v670
  %672 = vdwg.mxu0
  %673 = vmatpush.xpose.msra.mxu0 0.0
  %674 = vmatpush.xpose.msra.mxu0 0.0
  %675 = vmatpush.xpose.msra.mxu0 0.0
  %676 = vmatpush.xpose.msra.mxu0 0.0
  %677 = vmatpush.xpose.msra.mxu0 0.0
  %678 = vmatpush.xpose.msra.mxu0 0.0
  %679 = vmatpush.xpose.msra.mxu0 0.0
  %680 = vmatpush.xpose.msra.mxu0 0.0
  %681 = vmatpush.xpose.msra.mxu0 0.0
  %682 = vmatpush.xpose.msra.mxu0 0.0
  %683 = vmatpush.xpose.msra.mxu0 0.0
  %684 = vmatpush.xpose.msra.mxu0 0.0
  %v685 = vand.u32 %v51, 4294901760
  %v686 = vsub.f32 %v51, %v685
  %687 = vmatpush.xpose.msra.mxu0 %v686
  %v688 = vand.u32 %v49, 4294901760
  %v689 = vsub.f32 %v49, %v688
  %690 = vmatpush.xpose.msra.mxu0 %v689
  %v691 = vand.u32 %v46, 4294901760
  %v692 = vsub.f32 %v46, %v691
  %693 = vmatpush.xpose.msra.mxu0 %v692
  %v694 = vand.u32 %v44, 4294901760
  %v695 = vsub.f32 %v44, %v694
  %696 = vmatpush.xpose.msra.mxu0 %v695
  %v697 = vand.u32 %v133, 4294901760
  %v698 = vsub.f32 %v133, %v697
  %699 = vmatmul.f32.gmra.mxu0 %v698
  %v700 = vpop.f32.mrf.mxu0
  %v701 = vadd.f32 %v667, %v700
  %v702 = vand.u32 %v141, 4294901760
  %v703 = vsub.f32 %v141, %v702
  %704 = vmatmul.f32.gmra.mxu0 %v703
  %v705 = vpop.f32.mrf.mxu0
  %v706 = vadd.f32 %v671, %v705
  %707 = vdwg.mxu0
  %708 = vmatpush.xpose.msra.mxu0 0.0
  %709 = vmatpush.xpose.msra.mxu0 0.0
  %710 = vmatpush.xpose.msra.mxu0 0.0
  %711 = vmatpush.xpose.msra.mxu0 0.0
  %712 = vmatpush.xpose.msra.mxu0 0.0
  %713 = vmatpush.xpose.msra.mxu0 0.0
  %714 = vmatpush.xpose.msra.mxu0 0.0
  %715 = vmatpush.xpose.msra.mxu0 0.0
  %716 = vmatpush.xpose.msra.mxu0 0.0
  %717 = vmatpush.xpose.msra.mxu0 0.0
  %718 = vmatpush.xpose.msra.mxu0 0.0
  %719 = vmatpush.xpose.msra.mxu0 0.0
  %v720 = vand.u32 %v51, 4294901760
  %721 = vmatpush.xpose.msra.mxu0 %v720
  %v722 = vand.u32 %v49, 4294901760
  %723 = vmatpush.xpose.msra.mxu0 %v722
  %v724 = vand.u32 %v46, 4294901760
  %725 = vmatpush.xpose.msra.mxu0 %v724
  %v726 = vand.u32 %v44, 4294901760
  %727 = vmatpush.xpose.msra.mxu0 %v726
  %v728 = vand.u32 %v133, 4294901760
  %v729 = vsub.f32 %v133, %v728
  %v730 = vand.u32 %v729, 4294901760
  %731 = vmatmul.f32.gmra.mxu0 %v730
  %v732 = vpop.f32.mrf.mxu0
  %v733 = vadd.f32 %v701, %v732
  %v734 = vand.u32 %v141, 4294901760
  %v735 = vsub.f32 %v141, %v734
  %v736 = vand.u32 %v735, 4294901760
  %737 = vmatmul.f32.gmra.mxu0 %v736
  %v738 = vpop.f32.mrf.mxu0
  %v739 = vadd.f32 %v706, %v738
  %740 = vdwg.mxu0
  %741 = vmatpush.xpose.msra.mxu0 0.0
  %742 = vmatpush.xpose.msra.mxu0 0.0
  %743 = vmatpush.xpose.msra.mxu0 0.0
  %744 = vmatpush.xpose.msra.mxu0 0.0
  %745 = vmatpush.xpose.msra.mxu0 0.0
  %746 = vmatpush.xpose.msra.mxu0 0.0
  %747 = vmatpush.xpose.msra.mxu0 0.0
  %748 = vmatpush.xpose.msra.mxu0 0.0
  %749 = vmatpush.xpose.msra.mxu0 0.0
  %750 = vmatpush.xpose.msra.mxu0 0.0
  %751 = vmatpush.xpose.msra.mxu0 0.0
  %752 = vmatpush.xpose.msra.mxu0 0.0
  %v753 = vand.u32 %v51, 4294901760
  %v754 = vsub.f32 %v51, %v753
  %v755 = vand.u32 %v754, 4294901760
  %756 = vmatpush.xpose.msra.mxu0 %v755
  %v757 = vand.u32 %v49, 4294901760
  %v758 = vsub.f32 %v49, %v757
  %v759 = vand.u32 %v758, 4294901760
  %760 = vmatpush.xpose.msra.mxu0 %v759
  %v761 = vand.u32 %v46, 4294901760
  %v762 = vsub.f32 %v46, %v761
  %v763 = vand.u32 %v762, 4294901760
  %764 = vmatpush.xpose.msra.mxu0 %v763
  %v765 = vand.u32 %v44, 4294901760
  %v766 = vsub.f32 %v44, %v765
  %v767 = vand.u32 %v766, 4294901760
  %768 = vmatpush.xpose.msra.mxu0 %v767
  %v769 = vand.u32 %v133, 4294901760
  %770 = vmatmul.f32.gmra.mxu0 %v769
  %v771 = vpop.f32.mrf.mxu0
  %v772 = vadd.f32 %v733, %v771
  %v773 = vand.u32 %v141, 4294901760
  %774 = vmatmul.f32.gmra.mxu0 %v773
  %v775 = vpop.f32.mrf.mxu0
  %v776 = vadd.f32 %v739, %v775
  %777 = vdwg.mxu0
  %778 = vmatpush.xpose.msra.mxu0 0.0
  %779 = vmatpush.xpose.msra.mxu0 0.0
  %780 = vmatpush.xpose.msra.mxu0 0.0
  %781 = vmatpush.xpose.msra.mxu0 0.0
  %782 = vmatpush.xpose.msra.mxu0 0.0
  %783 = vmatpush.xpose.msra.mxu0 0.0
  %784 = vmatpush.xpose.msra.mxu0 0.0
  %785 = vmatpush.xpose.msra.mxu0 0.0
  %786 = vmatpush.xpose.msra.mxu0 0.0
  %787 = vmatpush.xpose.msra.mxu0 0.0
  %788 = vmatpush.xpose.msra.mxu0 0.0
  %789 = vmatpush.xpose.msra.mxu0 0.0
  %v790 = vand.u32 %v51, 4294901760
  %791 = vmatpush.xpose.msra.mxu0 %v790
  %v792 = vand.u32 %v49, 4294901760
  %793 = vmatpush.xpose.msra.mxu0 %v792
  %v794 = vand.u32 %v46, 4294901760
  %795 = vmatpush.xpose.msra.mxu0 %v794
  %v796 = vand.u32 %v44, 4294901760
  %797 = vmatpush.xpose.msra.mxu0 %v796
  %v798 = vand.u32 %v133, 4294901760
  %799 = vmatmul.f32.gmra.mxu0 %v798
  %v800 = vpop.f32.mrf.mxu0
  %v801 = vadd.f32 %v772, %v800
  %v802 = vand.u32 %v141, 4294901760
  %803 = vmatmul.f32.gmra.mxu0 %v802
  %v804 = vpop.f32.mrf.mxu0
  %v805 = vadd.f32 %v776, %v804
  %806 = vdwg.mxu0
  %807 = vmatpush.xpose.msra.mxu0 0.0
  %808 = vmatpush.xpose.msra.mxu0 0.0
  %809 = vmatpush.xpose.msra.mxu0 0.0
  %810 = vmatpush.xpose.msra.mxu0 0.0
  %811 = vmatpush.xpose.msra.mxu0 0.0
  %812 = vmatpush.xpose.msra.mxu0 0.0
  %813 = vmatpush.xpose.msra.mxu0 0.0
  %814 = vmatpush.xpose.msra.mxu0 0.0
  %815 = vmatpush.xpose.msra.mxu0 0.0
  %816 = vmatpush.xpose.msra.mxu0 0.0
  %817 = vmatpush.xpose.msra.mxu0 0.0
  %818 = vmatpush.xpose.msra.mxu0 0.0
  %v819 = vand.u32 %v66, 4294901760
  %820 = vmatpush.xpose.msra.mxu0 %v819
  %v821 = vand.u32 %v64, 4294901760
  %822 = vmatpush.xpose.msra.mxu0 %v821
  %v823 = vand.u32 %v61, 4294901760
  %824 = vmatpush.xpose.msra.mxu0 %v823
  %v825 = vand.u32 %v59, 4294901760
  %826 = vmatpush.xpose.msra.mxu0 %v825
  %v827 = vand.u32 %v134, 4294901760
  %v828 = vsub.f32 %v134, %v827
  %v829 = vand.u32 %v828, 4294901760
  %v830 = vsub.f32 %v828, %v829
  %v831 = vand.u32 %v830, 4294901760
  %832 = vmatmul.f32.gmra.mxu0 %v831
  %v833 = vpop.f32.mrf.mxu0
  %v834 = vadd.f32 %v801, %v833
  %v835 = vand.u32 %v142, 4294901760
  %v836 = vsub.f32 %v142, %v835
  %v837 = vand.u32 %v836, 4294901760
  %v838 = vsub.f32 %v836, %v837
  %v839 = vand.u32 %v838, 4294901760
  %840 = vmatmul.f32.gmra.mxu0 %v839
  %v841 = vpop.f32.mrf.mxu0
  %v842 = vadd.f32 %v805, %v841
  %843 = vdwg.mxu0
  %844 = vmatpush.xpose.msra.mxu0 0.0
  %845 = vmatpush.xpose.msra.mxu0 0.0
  %846 = vmatpush.xpose.msra.mxu0 0.0
  %847 = vmatpush.xpose.msra.mxu0 0.0
  %848 = vmatpush.xpose.msra.mxu0 0.0
  %849 = vmatpush.xpose.msra.mxu0 0.0
  %850 = vmatpush.xpose.msra.mxu0 0.0
  %851 = vmatpush.xpose.msra.mxu0 0.0
  %852 = vmatpush.xpose.msra.mxu0 0.0
  %853 = vmatpush.xpose.msra.mxu0 0.0
  %854 = vmatpush.xpose.msra.mxu0 0.0
  %855 = vmatpush.xpose.msra.mxu0 0.0
  %v856 = vand.u32 %v66, 4294901760
  %v857 = vsub.f32 %v66, %v856
  %v858 = vand.u32 %v857, 4294901760
  %v859 = vsub.f32 %v857, %v858
  %v860 = vand.u32 %v859, 4294901760
  %861 = vmatpush.xpose.msra.mxu0 %v860
  %v862 = vand.u32 %v64, 4294901760
  %v863 = vsub.f32 %v64, %v862
  %v864 = vand.u32 %v863, 4294901760
  %v865 = vsub.f32 %v863, %v864
  %v866 = vand.u32 %v865, 4294901760
  %867 = vmatpush.xpose.msra.mxu0 %v866
  %v868 = vand.u32 %v61, 4294901760
  %v869 = vsub.f32 %v61, %v868
  %v870 = vand.u32 %v869, 4294901760
  %v871 = vsub.f32 %v869, %v870
  %v872 = vand.u32 %v871, 4294901760
  %873 = vmatpush.xpose.msra.mxu0 %v872
  %v874 = vand.u32 %v59, 4294901760
  %v875 = vsub.f32 %v59, %v874
  %v876 = vand.u32 %v875, 4294901760
  %v877 = vsub.f32 %v875, %v876
  %v878 = vand.u32 %v877, 4294901760
  %879 = vmatpush.xpose.msra.mxu0 %v878
  %v880 = vand.u32 %v134, 4294901760
  %881 = vmatmul.f32.gmra.mxu0 %v880
  %v882 = vpop.f32.mrf.mxu0
  %v883 = vadd.f32 %v834, %v882
  %v884 = vand.u32 %v142, 4294901760
  %885 = vmatmul.f32.gmra.mxu0 %v884
  %v886 = vpop.f32.mrf.mxu0
  %v887 = vadd.f32 %v842, %v886
  %888 = vdwg.mxu0
  %889 = vmatpush.xpose.msra.mxu0 0.0
  %890 = vmatpush.xpose.msra.mxu0 0.0
  %891 = vmatpush.xpose.msra.mxu0 0.0
  %892 = vmatpush.xpose.msra.mxu0 0.0
  %893 = vmatpush.xpose.msra.mxu0 0.0
  %894 = vmatpush.xpose.msra.mxu0 0.0
  %895 = vmatpush.xpose.msra.mxu0 0.0
  %896 = vmatpush.xpose.msra.mxu0 0.0
  %897 = vmatpush.xpose.msra.mxu0 0.0
  %898 = vmatpush.xpose.msra.mxu0 0.0
  %899 = vmatpush.xpose.msra.mxu0 0.0
  %900 = vmatpush.xpose.msra.mxu0 0.0
  %v901 = vand.u32 %v66, 4294901760
  %v902 = vsub.f32 %v66, %v901
  %903 = vmatpush.xpose.msra.mxu0 %v902
  %v904 = vand.u32 %v64, 4294901760
  %v905 = vsub.f32 %v64, %v904
  %906 = vmatpush.xpose.msra.mxu0 %v905
  %v907 = vand.u32 %v61, 4294901760
  %v908 = vsub.f32 %v61, %v907
  %909 = vmatpush.xpose.msra.mxu0 %v908
  %v910 = vand.u32 %v59, 4294901760
  %v911 = vsub.f32 %v59, %v910
  %912 = vmatpush.xpose.msra.mxu0 %v911
  %v913 = vand.u32 %v134, 4294901760
  %v914 = vsub.f32 %v134, %v913
  %915 = vmatmul.f32.gmra.mxu0 %v914
  %v916 = vpop.f32.mrf.mxu0
  %v917 = vadd.f32 %v883, %v916
  %v918 = vand.u32 %v142, 4294901760
  %v919 = vsub.f32 %v142, %v918
  %920 = vmatmul.f32.gmra.mxu0 %v919
  %v921 = vpop.f32.mrf.mxu0
  %v922 = vadd.f32 %v887, %v921
  %923 = vdwg.mxu0
  %924 = vmatpush.xpose.msra.mxu0 0.0
  %925 = vmatpush.xpose.msra.mxu0 0.0
  %926 = vmatpush.xpose.msra.mxu0 0.0
  %927 = vmatpush.xpose.msra.mxu0 0.0
  %928 = vmatpush.xpose.msra.mxu0 0.0
  %929 = vmatpush.xpose.msra.mxu0 0.0
  %930 = vmatpush.xpose.msra.mxu0 0.0
  %931 = vmatpush.xpose.msra.mxu0 0.0
  %932 = vmatpush.xpose.msra.mxu0 0.0
  %933 = vmatpush.xpose.msra.mxu0 0.0
  %934 = vmatpush.xpose.msra.mxu0 0.0
  %935 = vmatpush.xpose.msra.mxu0 0.0
  %v936 = vand.u32 %v66, 4294901760
  %937 = vmatpush.xpose.msra.mxu0 %v936
  %v938 = vand.u32 %v64, 4294901760
  %939 = vmatpush.xpose.msra.mxu0 %v938
  %v940 = vand.u32 %v61, 4294901760
  %941 = vmatpush.xpose.msra.mxu0 %v940
  %v942 = vand.u32 %v59, 4294901760
  %943 = vmatpush.xpose.msra.mxu0 %v942
  %v944 = vand.u32 %v134, 4294901760
  %v945 = vsub.f32 %v134, %v944
  %v946 = vand.u32 %v945, 4294901760
  %947 = vmatmul.f32.gmra.mxu0 %v946
  %v948 = vpop.f32.mrf.mxu0
  %v949 = vadd.f32 %v917, %v948
  %v950 = vand.u32 %v142, 4294901760
  %v951 = vsub.f32 %v142, %v950
  %v952 = vand.u32 %v951, 4294901760
  %953 = vmatmul.f32.gmra.mxu0 %v952
  %v954 = vpop.f32.mrf.mxu0
  %v955 = vadd.f32 %v922, %v954
  %956 = vdwg.mxu0
  %957 = vmatpush.xpose.msra.mxu0 0.0
  %958 = vmatpush.xpose.msra.mxu0 0.0
  %959 = vmatpush.xpose.msra.mxu0 0.0
  %960 = vmatpush.xpose.msra.mxu0 0.0
  %961 = vmatpush.xpose.msra.mxu0 0.0
  %962 = vmatpush.xpose.msra.mxu0 0.0
  %963 = vmatpush.xpose.msra.mxu0 0.0
  %964 = vmatpush.xpose.msra.mxu0 0.0
  %965 = vmatpush.xpose.msra.mxu0 0.0
  %966 = vmatpush.xpose.msra.mxu0 0.0
  %967 = vmatpush.xpose.msra.mxu0 0.0
  %968 = vmatpush.xpose.msra.mxu0 0.0
  %v969 = vand.u32 %v66, 4294901760
  %v970 = vsub.f32 %v66, %v969
  %v971 = vand.u32 %v970, 4294901760
  %972 = vmatpush.xpose.msra.mxu0 %v971
  %v973 = vand.u32 %v64, 4294901760
  %v974 = vsub.f32 %v64, %v973
  %v975 = vand.u32 %v974, 4294901760
  %976 = vmatpush.xpose.msra.mxu0 %v975
  %v977 = vand.u32 %v61, 4294901760
  %v978 = vsub.f32 %v61, %v977
  %v979 = vand.u32 %v978, 4294901760
  %980 = vmatpush.xpose.msra.mxu0 %v979
  %v981 = vand.u32 %v59, 4294901760
  %v982 = vsub.f32 %v59, %v981
  %v983 = vand.u32 %v982, 4294901760
  %984 = vmatpush.xpose.msra.mxu0 %v983
  %v985 = vand.u32 %v134, 4294901760
  %986 = vmatmul.f32.gmra.mxu0 %v985
  %v987 = vpop.f32.mrf.mxu0
  %v988 = vadd.f32 %v949, %v987
  %v989 = vand.u32 %v142, 4294901760
  %990 = vmatmul.f32.gmra.mxu0 %v989
  %v991 = vpop.f32.mrf.mxu0
  %v992 = vadd.f32 %v955, %v991
  %993 = vdwg.mxu0
  %994 = vmatpush.xpose.msra.mxu0 0.0
  %995 = vmatpush.xpose.msra.mxu0 0.0
  %996 = vmatpush.xpose.msra.mxu0 0.0
  %997 = vmatpush.xpose.msra.mxu0 0.0
  %998 = vmatpush.xpose.msra.mxu0 0.0
  %999 = vmatpush.xpose.msra.mxu0 0.0
  %1000 = vmatpush.xpose.msra.mxu0 0.0
  %1001 = vmatpush.xpose.msra.mxu0 0.0
  %1002 = vmatpush.xpose.msra.mxu0 0.0
  %1003 = vmatpush.xpose.msra.mxu0 0.0
  %1004 = vmatpush.xpose.msra.mxu0 0.0
  %1005 = vmatpush.xpose.msra.mxu0 0.0
  %v1006 = vand.u32 %v66, 4294901760
  %1007 = vmatpush.xpose.msra.mxu0 %v1006
  %v1008 = vand.u32 %v64, 4294901760
  %1009 = vmatpush.xpose.msra.mxu0 %v1008
  %v1010 = vand.u32 %v61, 4294901760
  %1011 = vmatpush.xpose.msra.mxu0 %v1010
  %v1012 = vand.u32 %v59, 4294901760
  %1013 = vmatpush.xpose.msra.mxu0 %v1012
  %v1014 = vand.u32 %v134, 4294901760
  %1015 = vmatmul.f32.gmra.mxu0 %v1014
  %v1016 = vpop.f32.mrf.mxu0
  %v1017 = vadd.f32 %v988, %v1016
  %v1018 = vand.u32 %v142, 4294901760
  %1019 = vmatmul.f32.gmra.mxu0 %v1018
  %v1020 = vpop.f32.mrf.mxu0
  %v1021 = vadd.f32 %v992, %v1020
  %1022 = vdwg.mxu0
  %1023 = vmatpush.xpose.msra.mxu0 0.0
  %1024 = vmatpush.xpose.msra.mxu0 0.0
  %1025 = vmatpush.xpose.msra.mxu0 0.0
  %1026 = vmatpush.xpose.msra.mxu0 0.0
  %1027 = vmatpush.xpose.msra.mxu0 0.0
  %1028 = vmatpush.xpose.msra.mxu0 0.0
  %1029 = vmatpush.xpose.msra.mxu0 0.0
  %1030 = vmatpush.xpose.msra.mxu0 0.0
  %1031 = vmatpush.xpose.msra.mxu0 0.0
  %1032 = vmatpush.xpose.msra.mxu0 0.0
  %1033 = vmatpush.xpose.msra.mxu0 0.0
  %1034 = vmatpush.xpose.msra.mxu0 0.0
  %v1035 = vand.u32 %v81, 4294901760
  %1036 = vmatpush.xpose.msra.mxu0 %v1035
  %v1037 = vand.u32 %v79, 4294901760
  %1038 = vmatpush.xpose.msra.mxu0 %v1037
  %v1039 = vand.u32 %v76, 4294901760
  %1040 = vmatpush.xpose.msra.mxu0 %v1039
  %v1041 = vand.u32 %v74, 4294901760
  %1042 = vmatpush.xpose.msra.mxu0 %v1041
  %v1043 = vand.u32 %v135, 4294901760
  %v1044 = vsub.f32 %v135, %v1043
  %v1045 = vand.u32 %v1044, 4294901760
  %v1046 = vsub.f32 %v1044, %v1045
  %v1047 = vand.u32 %v1046, 4294901760
  %1048 = vmatmul.f32.gmra.mxu0 %v1047
  %v1049 = vpop.f32.mrf.mxu0
  %v1050 = vadd.f32 %v1017, %v1049
  %v1051 = vand.u32 %v143, 4294901760
  %v1052 = vsub.f32 %v143, %v1051
  %v1053 = vand.u32 %v1052, 4294901760
  %v1054 = vsub.f32 %v1052, %v1053
  %v1055 = vand.u32 %v1054, 4294901760
  %1056 = vmatmul.f32.gmra.mxu0 %v1055
  %v1057 = vpop.f32.mrf.mxu0
  %v1058 = vadd.f32 %v1021, %v1057
  %1059 = vdwg.mxu0
  %1060 = vmatpush.xpose.msra.mxu0 0.0
  %1061 = vmatpush.xpose.msra.mxu0 0.0
  %1062 = vmatpush.xpose.msra.mxu0 0.0
  %1063 = vmatpush.xpose.msra.mxu0 0.0
  %1064 = vmatpush.xpose.msra.mxu0 0.0
  %1065 = vmatpush.xpose.msra.mxu0 0.0
  %1066 = vmatpush.xpose.msra.mxu0 0.0
  %1067 = vmatpush.xpose.msra.mxu0 0.0
  %1068 = vmatpush.xpose.msra.mxu0 0.0
  %1069 = vmatpush.xpose.msra.mxu0 0.0
  %1070 = vmatpush.xpose.msra.mxu0 0.0
  %1071 = vmatpush.xpose.msra.mxu0 0.0
  %v1072 = vand.u32 %v81, 4294901760
  %v1073 = vsub.f32 %v81, %v1072
  %v1074 = vand.u32 %v1073, 4294901760
  %v1075 = vsub.f32 %v1073, %v1074
  %v1076 = vand.u32 %v1075, 4294901760
  %1077 = vmatpush.xpose.msra.mxu0 %v1076
  %v1078 = vand.u32 %v79, 4294901760
  %v1079 = vsub.f32 %v79, %v1078
  %v1080 = vand.u32 %v1079, 4294901760
  %v1081 = vsub.f32 %v1079, %v1080
  %v1082 = vand.u32 %v1081, 4294901760
  %1083 = vmatpush.xpose.msra.mxu0 %v1082
  %v1084 = vand.u32 %v76, 4294901760
  %v1085 = vsub.f32 %v76, %v1084
  %v1086 = vand.u32 %v1085, 4294901760
  %v1087 = vsub.f32 %v1085, %v1086
  %v1088 = vand.u32 %v1087, 4294901760
  %1089 = vmatpush.xpose.msra.mxu0 %v1088
  %v1090 = vand.u32 %v74, 4294901760
  %v1091 = vsub.f32 %v74, %v1090
  %v1092 = vand.u32 %v1091, 4294901760
  %v1093 = vsub.f32 %v1091, %v1092
  %v1094 = vand.u32 %v1093, 4294901760
  %1095 = vmatpush.xpose.msra.mxu0 %v1094
  %v1096 = vand.u32 %v135, 4294901760
  %1097 = vmatmul.f32.gmra.mxu0 %v1096
  %v1098 = vpop.f32.mrf.mxu0
  %v1099 = vadd.f32 %v1050, %v1098
  %v1100 = vand.u32 %v143, 4294901760
  %1101 = vmatmul.f32.gmra.mxu0 %v1100
  %v1102 = vpop.f32.mrf.mxu0
  %v1103 = vadd.f32 %v1058, %v1102
  %1104 = vdwg.mxu0
  %1105 = vmatpush.xpose.msra.mxu0 0.0
  %1106 = vmatpush.xpose.msra.mxu0 0.0
  %1107 = vmatpush.xpose.msra.mxu0 0.0
  %1108 = vmatpush.xpose.msra.mxu0 0.0
  %1109 = vmatpush.xpose.msra.mxu0 0.0
  %1110 = vmatpush.xpose.msra.mxu0 0.0
  %1111 = vmatpush.xpose.msra.mxu0 0.0
  %1112 = vmatpush.xpose.msra.mxu0 0.0
  %1113 = vmatpush.xpose.msra.mxu0 0.0
  %1114 = vmatpush.xpose.msra.mxu0 0.0
  %1115 = vmatpush.xpose.msra.mxu0 0.0
  %1116 = vmatpush.xpose.msra.mxu0 0.0
  %v1117 = vand.u32 %v81, 4294901760
  %v1118 = vsub.f32 %v81, %v1117
  %1119 = vmatpush.xpose.msra.mxu0 %v1118
  %v1120 = vand.u32 %v79, 4294901760
  %v1121 = vsub.f32 %v79, %v1120
  %1122 = vmatpush.xpose.msra.mxu0 %v1121
  %v1123 = vand.u32 %v76, 4294901760
  %v1124 = vsub.f32 %v76, %v1123
  %1125 = vmatpush.xpose.msra.mxu0 %v1124
  %v1126 = vand.u32 %v74, 4294901760
  %v1127 = vsub.f32 %v74, %v1126
  %1128 = vmatpush.xpose.msra.mxu0 %v1127
  %v1129 = vand.u32 %v135, 4294901760
  %v1130 = vsub.f32 %v135, %v1129
  %1131 = vmatmul.f32.gmra.mxu0 %v1130
  %v1132 = vpop.f32.mrf.mxu0
  %v1133 = vadd.f32 %v1099, %v1132
  %v1134 = vand.u32 %v143, 4294901760
  %v1135 = vsub.f32 %v143, %v1134
  %1136 = vmatmul.f32.gmra.mxu0 %v1135
  %v1137 = vpop.f32.mrf.mxu0
  %v1138 = vadd.f32 %v1103, %v1137
  %1139 = vdwg.mxu0
  %1140 = vmatpush.xpose.msra.mxu0 0.0
  %1141 = vmatpush.xpose.msra.mxu0 0.0
  %1142 = vmatpush.xpose.msra.mxu0 0.0
  %1143 = vmatpush.xpose.msra.mxu0 0.0
  %1144 = vmatpush.xpose.msra.mxu0 0.0
  %1145 = vmatpush.xpose.msra.mxu0 0.0
  %1146 = vmatpush.xpose.msra.mxu0 0.0
  %1147 = vmatpush.xpose.msra.mxu0 0.0
  %1148 = vmatpush.xpose.msra.mxu0 0.0
  %1149 = vmatpush.xpose.msra.mxu0 0.0
  %1150 = vmatpush.xpose.msra.mxu0 0.0
  %1151 = vmatpush.xpose.msra.mxu0 0.0
  %v1152 = vand.u32 %v81, 4294901760
  %1153 = vmatpush.xpose.msra.mxu0 %v1152
  %v1154 = vand.u32 %v79, 4294901760
  %1155 = vmatpush.xpose.msra.mxu0 %v1154
  %v1156 = vand.u32 %v76, 4294901760
  %1157 = vmatpush.xpose.msra.mxu0 %v1156
  %v1158 = vand.u32 %v74, 4294901760
  %1159 = vmatpush.xpose.msra.mxu0 %v1158
  %v1160 = vand.u32 %v135, 4294901760
  %v1161 = vsub.f32 %v135, %v1160
  %v1162 = vand.u32 %v1161, 4294901760
  %1163 = vmatmul.f32.gmra.mxu0 %v1162
  %v1164 = vpop.f32.mrf.mxu0
  %v1165 = vadd.f32 %v1133, %v1164
  %v1166 = vand.u32 %v143, 4294901760
  %v1167 = vsub.f32 %v143, %v1166
  %v1168 = vand.u32 %v1167, 4294901760
  %1169 = vmatmul.f32.gmra.mxu0 %v1168
  %v1170 = vpop.f32.mrf.mxu0
  %v1171 = vadd.f32 %v1138, %v1170
  %1172 = vdwg.mxu0
  %1173 = vmatpush.xpose.msra.mxu0 0.0
  %1174 = vmatpush.xpose.msra.mxu0 0.0
  %1175 = vmatpush.xpose.msra.mxu0 0.0
  %1176 = vmatpush.xpose.msra.mxu0 0.0
  %1177 = vmatpush.xpose.msra.mxu0 0.0
  %1178 = vmatpush.xpose.msra.mxu0 0.0
  %1179 = vmatpush.xpose.msra.mxu0 0.0
  %1180 = vmatpush.xpose.msra.mxu0 0.0
  %1181 = vmatpush.xpose.msra.mxu0 0.0
  %1182 = vmatpush.xpose.msra.mxu0 0.0
  %1183 = vmatpush.xpose.msra.mxu0 0.0
  %1184 = vmatpush.xpose.msra.mxu0 0.0
  %v1185 = vand.u32 %v81, 4294901760
  %v1186 = vsub.f32 %v81, %v1185
  %v1187 = vand.u32 %v1186, 4294901760
  %1188 = vmatpush.xpose.msra.mxu0 %v1187
  %v1189 = vand.u32 %v79, 4294901760
  %v1190 = vsub.f32 %v79, %v1189
  %v1191 = vand.u32 %v1190, 4294901760
  %1192 = vmatpush.xpose.msra.mxu0 %v1191
  %v1193 = vand.u32 %v76, 4294901760
  %v1194 = vsub.f32 %v76, %v1193
  %v1195 = vand.u32 %v1194, 4294901760
  %1196 = vmatpush.xpose.msra.mxu0 %v1195
  %v1197 = vand.u32 %v74, 4294901760
  %v1198 = vsub.f32 %v74, %v1197
  %v1199 = vand.u32 %v1198, 4294901760
  %1200 = vmatpush.xpose.msra.mxu0 %v1199
  %v1201 = vand.u32 %v135, 4294901760
  %1202 = vmatmul.f32.gmra.mxu0 %v1201
  %v1203 = vpop.f32.mrf.mxu0
  %v1204 = vadd.f32 %v1165, %v1203
  %v1205 = vand.u32 %v143, 4294901760
  %1206 = vmatmul.f32.gmra.mxu0 %v1205
  %v1207 = vpop.f32.mrf.mxu0
  %v1208 = vadd.f32 %v1171, %v1207
  %1209 = vdwg.mxu0
  %1210 = vmatpush.xpose.msra.mxu0 0.0
  %1211 = vmatpush.xpose.msra.mxu0 0.0
  %1212 = vmatpush.xpose.msra.mxu0 0.0
  %1213 = vmatpush.xpose.msra.mxu0 0.0
  %1214 = vmatpush.xpose.msra.mxu0 0.0
  %1215 = vmatpush.xpose.msra.mxu0 0.0
  %1216 = vmatpush.xpose.msra.mxu0 0.0
  %1217 = vmatpush.xpose.msra.mxu0 0.0
  %1218 = vmatpush.xpose.msra.mxu0 0.0
  %1219 = vmatpush.xpose.msra.mxu0 0.0
  %1220 = vmatpush.xpose.msra.mxu0 0.0
  %1221 = vmatpush.xpose.msra.mxu0 0.0
  %v1222 = vand.u32 %v81, 4294901760
  %1223 = vmatpush.xpose.msra.mxu0 %v1222
  %v1224 = vand.u32 %v79, 4294901760
  %1225 = vmatpush.xpose.msra.mxu0 %v1224
  %v1226 = vand.u32 %v76, 4294901760
  %1227 = vmatpush.xpose.msra.mxu0 %v1226
  %v1228 = vand.u32 %v74, 4294901760
  %1229 = vmatpush.xpose.msra.mxu0 %v1228
  %v1230 = vand.u32 %v135, 4294901760
  %1231 = vmatmul.f32.gmra.mxu0 %v1230
  %v1232 = vpop.f32.mrf.mxu0
  %v1233 = vadd.f32 %v1204, %v1232
  %v1234 = vand.u32 %v143, 4294901760
  %1235 = vmatmul.f32.gmra.mxu0 %v1234
  %v1236 = vpop.f32.mrf.mxu0
  %v1237 = vadd.f32 %v1208, %v1236
  %1238 = vdwg.mxu0
  %1239 = vmatpush.xpose.msra.mxu0 0.0
  %1240 = vmatpush.xpose.msra.mxu0 0.0
  %1241 = vmatpush.xpose.msra.mxu0 0.0
  %1242 = vmatpush.xpose.msra.mxu0 0.0
  %1243 = vmatpush.xpose.msra.mxu0 0.0
  %1244 = vmatpush.xpose.msra.mxu0 0.0
  %1245 = vmatpush.xpose.msra.mxu0 0.0
  %1246 = vmatpush.xpose.msra.mxu0 0.0
  %1247 = vmatpush.xpose.msra.mxu0 0.0
  %1248 = vmatpush.xpose.msra.mxu0 0.0
  %1249 = vmatpush.xpose.msra.mxu0 0.0
  %1250 = vmatpush.xpose.msra.mxu0 0.0
  %v1251 = vand.u32 %v96, 4294901760
  %1252 = vmatpush.xpose.msra.mxu0 %v1251
  %v1253 = vand.u32 %v94, 4294901760
  %1254 = vmatpush.xpose.msra.mxu0 %v1253
  %v1255 = vand.u32 %v91, 4294901760
  %1256 = vmatpush.xpose.msra.mxu0 %v1255
  %v1257 = vand.u32 %v89, 4294901760
  %1258 = vmatpush.xpose.msra.mxu0 %v1257
  %v1259 = vand.u32 %v136, 4294901760
  %v1260 = vsub.f32 %v136, %v1259
  %v1261 = vand.u32 %v1260, 4294901760
  %v1262 = vsub.f32 %v1260, %v1261
  %v1263 = vand.u32 %v1262, 4294901760
  %1264 = vmatmul.f32.gmra.mxu0 %v1263
  %v1265 = vpop.f32.mrf.mxu0
  %v1266 = vadd.f32 %v1233, %v1265
  %v1267 = vand.u32 %v144, 4294901760
  %v1268 = vsub.f32 %v144, %v1267
  %v1269 = vand.u32 %v1268, 4294901760
  %v1270 = vsub.f32 %v1268, %v1269
  %v1271 = vand.u32 %v1270, 4294901760
  %1272 = vmatmul.f32.gmra.mxu0 %v1271
  %v1273 = vpop.f32.mrf.mxu0
  %v1274 = vadd.f32 %v1237, %v1273
  %1275 = vdwg.mxu0
  %1276 = vmatpush.xpose.msra.mxu0 0.0
  %1277 = vmatpush.xpose.msra.mxu0 0.0
  %1278 = vmatpush.xpose.msra.mxu0 0.0
  %1279 = vmatpush.xpose.msra.mxu0 0.0
  %1280 = vmatpush.xpose.msra.mxu0 0.0
  %1281 = vmatpush.xpose.msra.mxu0 0.0
  %1282 = vmatpush.xpose.msra.mxu0 0.0
  %1283 = vmatpush.xpose.msra.mxu0 0.0
  %1284 = vmatpush.xpose.msra.mxu0 0.0
  %1285 = vmatpush.xpose.msra.mxu0 0.0
  %1286 = vmatpush.xpose.msra.mxu0 0.0
  %1287 = vmatpush.xpose.msra.mxu0 0.0
  %v1288 = vand.u32 %v96, 4294901760
  %v1289 = vsub.f32 %v96, %v1288
  %v1290 = vand.u32 %v1289, 4294901760
  %v1291 = vsub.f32 %v1289, %v1290
  %v1292 = vand.u32 %v1291, 4294901760
  %1293 = vmatpush.xpose.msra.mxu0 %v1292
  %v1294 = vand.u32 %v94, 4294901760
  %v1295 = vsub.f32 %v94, %v1294
  %v1296 = vand.u32 %v1295, 4294901760
  %v1297 = vsub.f32 %v1295, %v1296
  %v1298 = vand.u32 %v1297, 4294901760
  %1299 = vmatpush.xpose.msra.mxu0 %v1298
  %v1300 = vand.u32 %v91, 4294901760
  %v1301 = vsub.f32 %v91, %v1300
  %v1302 = vand.u32 %v1301, 4294901760
  %v1303 = vsub.f32 %v1301, %v1302
  %v1304 = vand.u32 %v1303, 4294901760
  %1305 = vmatpush.xpose.msra.mxu0 %v1304
  %v1306 = vand.u32 %v89, 4294901760
  %v1307 = vsub.f32 %v89, %v1306
  %v1308 = vand.u32 %v1307, 4294901760
  %v1309 = vsub.f32 %v1307, %v1308
  %v1310 = vand.u32 %v1309, 4294901760
  %1311 = vmatpush.xpose.msra.mxu0 %v1310
  %v1312 = vand.u32 %v136, 4294901760
  %1313 = vmatmul.f32.gmra.mxu0 %v1312
  %v1314 = vpop.f32.mrf.mxu0
  %v1315 = vadd.f32 %v1266, %v1314
  %v1316 = vand.u32 %v144, 4294901760
  %1317 = vmatmul.f32.gmra.mxu0 %v1316
  %v1318 = vpop.f32.mrf.mxu0
  %v1319 = vadd.f32 %v1274, %v1318
  %1320 = vdwg.mxu0
  %1321 = vmatpush.xpose.msra.mxu0 0.0
  %1322 = vmatpush.xpose.msra.mxu0 0.0
  %1323 = vmatpush.xpose.msra.mxu0 0.0
  %1324 = vmatpush.xpose.msra.mxu0 0.0
  %1325 = vmatpush.xpose.msra.mxu0 0.0
  %1326 = vmatpush.xpose.msra.mxu0 0.0
  %1327 = vmatpush.xpose.msra.mxu0 0.0
  %1328 = vmatpush.xpose.msra.mxu0 0.0
  %1329 = vmatpush.xpose.msra.mxu0 0.0
  %1330 = vmatpush.xpose.msra.mxu0 0.0
  %1331 = vmatpush.xpose.msra.mxu0 0.0
  %1332 = vmatpush.xpose.msra.mxu0 0.0
  %v1333 = vand.u32 %v96, 4294901760
  %v1334 = vsub.f32 %v96, %v1333
  %1335 = vmatpush.xpose.msra.mxu0 %v1334
  %v1336 = vand.u32 %v94, 4294901760
  %v1337 = vsub.f32 %v94, %v1336
  %1338 = vmatpush.xpose.msra.mxu0 %v1337
  %v1339 = vand.u32 %v91, 4294901760
  %v1340 = vsub.f32 %v91, %v1339
  %1341 = vmatpush.xpose.msra.mxu0 %v1340
  %v1342 = vand.u32 %v89, 4294901760
  %v1343 = vsub.f32 %v89, %v1342
  %1344 = vmatpush.xpose.msra.mxu0 %v1343
  %v1345 = vand.u32 %v136, 4294901760
  %v1346 = vsub.f32 %v136, %v1345
  %1347 = vmatmul.f32.gmra.mxu0 %v1346
  %v1348 = vpop.f32.mrf.mxu0
  %v1349 = vadd.f32 %v1315, %v1348
  %v1350 = vand.u32 %v144, 4294901760
  %v1351 = vsub.f32 %v144, %v1350
  %1352 = vmatmul.f32.gmra.mxu0 %v1351
  %v1353 = vpop.f32.mrf.mxu0
  %v1354 = vadd.f32 %v1319, %v1353
  %1355 = vdwg.mxu0
  %1356 = vmatpush.xpose.msra.mxu0 0.0
  %1357 = vmatpush.xpose.msra.mxu0 0.0
  %1358 = vmatpush.xpose.msra.mxu0 0.0
  %1359 = vmatpush.xpose.msra.mxu0 0.0
  %1360 = vmatpush.xpose.msra.mxu0 0.0
  %1361 = vmatpush.xpose.msra.mxu0 0.0
  %1362 = vmatpush.xpose.msra.mxu0 0.0
  %1363 = vmatpush.xpose.msra.mxu0 0.0
  %1364 = vmatpush.xpose.msra.mxu0 0.0
  %1365 = vmatpush.xpose.msra.mxu0 0.0
  %1366 = vmatpush.xpose.msra.mxu0 0.0
  %1367 = vmatpush.xpose.msra.mxu0 0.0
  %v1368 = vand.u32 %v96, 4294901760
  %1369 = vmatpush.xpose.msra.mxu0 %v1368
  %v1370 = vand.u32 %v94, 4294901760
  %1371 = vmatpush.xpose.msra.mxu0 %v1370
  %v1372 = vand.u32 %v91, 4294901760
  %1373 = vmatpush.xpose.msra.mxu0 %v1372
  %v1374 = vand.u32 %v89, 4294901760
  %1375 = vmatpush.xpose.msra.mxu0 %v1374
  %v1376 = vand.u32 %v136, 4294901760
  %v1377 = vsub.f32 %v136, %v1376
  %v1378 = vand.u32 %v1377, 4294901760
  %1379 = vmatmul.f32.gmra.mxu0 %v1378
  %v1380 = vpop.f32.mrf.mxu0
  %v1381 = vadd.f32 %v1349, %v1380
  %v1382 = vand.u32 %v144, 4294901760
  %v1383 = vsub.f32 %v144, %v1382
  %v1384 = vand.u32 %v1383, 4294901760
  %1385 = vmatmul.f32.gmra.mxu0 %v1384
  %v1386 = vpop.f32.mrf.mxu0
  %v1387 = vadd.f32 %v1354, %v1386
  %1388 = vdwg.mxu0
  %1389 = vmatpush.xpose.msra.mxu0 0.0
  %1390 = vmatpush.xpose.msra.mxu0 0.0
  %1391 = vmatpush.xpose.msra.mxu0 0.0
  %1392 = vmatpush.xpose.msra.mxu0 0.0
  %1393 = vmatpush.xpose.msra.mxu0 0.0
  %1394 = vmatpush.xpose.msra.mxu0 0.0
  %1395 = vmatpush.xpose.msra.mxu0 0.0
  %1396 = vmatpush.xpose.msra.mxu0 0.0
  %1397 = vmatpush.xpose.msra.mxu0 0.0
  %1398 = vmatpush.xpose.msra.mxu0 0.0
  %1399 = vmatpush.xpose.msra.mxu0 0.0
  %1400 = vmatpush.xpose.msra.mxu0 0.0
  %v1401 = vand.u32 %v96, 4294901760
  %v1402 = vsub.f32 %v96, %v1401
  %v1403 = vand.u32 %v1402, 4294901760
  %1404 = vmatpush.xpose.msra.mxu0 %v1403
  %v1405 = vand.u32 %v94, 4294901760
  %v1406 = vsub.f32 %v94, %v1405
  %v1407 = vand.u32 %v1406, 4294901760
  %1408 = vmatpush.xpose.msra.mxu0 %v1407
  %v1409 = vand.u32 %v91, 4294901760
  %v1410 = vsub.f32 %v91, %v1409
  %v1411 = vand.u32 %v1410, 4294901760
  %1412 = vmatpush.xpose.msra.mxu0 %v1411
  %v1413 = vand.u32 %v89, 4294901760
  %v1414 = vsub.f32 %v89, %v1413
  %v1415 = vand.u32 %v1414, 4294901760
  %1416 = vmatpush.xpose.msra.mxu0 %v1415
  %v1417 = vand.u32 %v136, 4294901760
  %1418 = vmatmul.f32.gmra.mxu0 %v1417
  %v1419 = vpop.f32.mrf.mxu0
  %v1420 = vadd.f32 %v1381, %v1419
  %v1421 = vand.u32 %v144, 4294901760
  %1422 = vmatmul.f32.gmra.mxu0 %v1421
  %v1423 = vpop.f32.mrf.mxu0
  %v1424 = vadd.f32 %v1387, %v1423
  %1425 = vdwg.mxu0
  %1426 = vmatpush.xpose.msra.mxu0 0.0
  %1427 = vmatpush.xpose.msra.mxu0 0.0
  %1428 = vmatpush.xpose.msra.mxu0 0.0
  %1429 = vmatpush.xpose.msra.mxu0 0.0
  %1430 = vmatpush.xpose.msra.mxu0 0.0
  %1431 = vmatpush.xpose.msra.mxu0 0.0
  %1432 = vmatpush.xpose.msra.mxu0 0.0
  %1433 = vmatpush.xpose.msra.mxu0 0.0
  %1434 = vmatpush.xpose.msra.mxu0 0.0
  %1435 = vmatpush.xpose.msra.mxu0 0.0
  %1436 = vmatpush.xpose.msra.mxu0 0.0
  %1437 = vmatpush.xpose.msra.mxu0 0.0
  %v1438 = vand.u32 %v96, 4294901760
  %1439 = vmatpush.xpose.msra.mxu0 %v1438
  %v1440 = vand.u32 %v94, 4294901760
  %1441 = vmatpush.xpose.msra.mxu0 %v1440
  %v1442 = vand.u32 %v91, 4294901760
  %1443 = vmatpush.xpose.msra.mxu0 %v1442
  %v1444 = vand.u32 %v89, 4294901760
  %1445 = vmatpush.xpose.msra.mxu0 %v1444
  %v1446 = vand.u32 %v136, 4294901760
  %1447 = vmatmul.f32.gmra.mxu0 %v1446
  %v1448 = vpop.f32.mrf.mxu0
  %v1449 = vadd.f32 %v1420, %v1448
  %v1450 = vand.u32 %v144, 4294901760
  %1451 = vmatmul.f32.gmra.mxu0 %v1450
  %v1452 = vpop.f32.mrf.mxu0
  %v1453 = vadd.f32 %v1424, %v1452
  %1454 = vdwg.mxu0
  %1455 = vmatpush.xpose.msra.mxu0 0.0
  %1456 = vmatpush.xpose.msra.mxu0 0.0
  %1457 = vmatpush.xpose.msra.mxu0 0.0
  %1458 = vmatpush.xpose.msra.mxu0 0.0
  %1459 = vmatpush.xpose.msra.mxu0 0.0
  %1460 = vmatpush.xpose.msra.mxu0 0.0
  %1461 = vmatpush.xpose.msra.mxu0 0.0
  %1462 = vmatpush.xpose.msra.mxu0 0.0
  %1463 = vmatpush.xpose.msra.mxu0 0.0
  %1464 = vmatpush.xpose.msra.mxu0 0.0
  %1465 = vmatpush.xpose.msra.mxu0 0.0
  %1466 = vmatpush.xpose.msra.mxu0 0.0
  %v1467 = vand.u32 %v111, 4294901760
  %1468 = vmatpush.xpose.msra.mxu0 %v1467
  %v1469 = vand.u32 %v109, 4294901760
  %1470 = vmatpush.xpose.msra.mxu0 %v1469
  %v1471 = vand.u32 %v106, 4294901760
  %1472 = vmatpush.xpose.msra.mxu0 %v1471
  %v1473 = vand.u32 %v104, 4294901760
  %1474 = vmatpush.xpose.msra.mxu0 %v1473
  %v1475 = vand.u32 %v137, 4294901760
  %v1476 = vsub.f32 %v137, %v1475
  %v1477 = vand.u32 %v1476, 4294901760
  %v1478 = vsub.f32 %v1476, %v1477
  %v1479 = vand.u32 %v1478, 4294901760
  %1480 = vmatmul.f32.gmra.mxu0 %v1479
  %v1481 = vpop.f32.mrf.mxu0
  %v1482 = vadd.f32 %v1449, %v1481
  %v1483 = vand.u32 %v145, 4294901760
  %v1484 = vsub.f32 %v145, %v1483
  %v1485 = vand.u32 %v1484, 4294901760
  %v1486 = vsub.f32 %v1484, %v1485
  %v1487 = vand.u32 %v1486, 4294901760
  %1488 = vmatmul.f32.gmra.mxu0 %v1487
  %v1489 = vpop.f32.mrf.mxu0
  %v1490 = vadd.f32 %v1453, %v1489
  %1491 = vdwg.mxu0
  %1492 = vmatpush.xpose.msra.mxu0 0.0
  %1493 = vmatpush.xpose.msra.mxu0 0.0
  %1494 = vmatpush.xpose.msra.mxu0 0.0
  %1495 = vmatpush.xpose.msra.mxu0 0.0
  %1496 = vmatpush.xpose.msra.mxu0 0.0
  %1497 = vmatpush.xpose.msra.mxu0 0.0
  %1498 = vmatpush.xpose.msra.mxu0 0.0
  %1499 = vmatpush.xpose.msra.mxu0 0.0
  %1500 = vmatpush.xpose.msra.mxu0 0.0
  %1501 = vmatpush.xpose.msra.mxu0 0.0
  %1502 = vmatpush.xpose.msra.mxu0 0.0
  %1503 = vmatpush.xpose.msra.mxu0 0.0
  %v1504 = vand.u32 %v111, 4294901760
  %v1505 = vsub.f32 %v111, %v1504
  %v1506 = vand.u32 %v1505, 4294901760
  %v1507 = vsub.f32 %v1505, %v1506
  %v1508 = vand.u32 %v1507, 4294901760
  %1509 = vmatpush.xpose.msra.mxu0 %v1508
  %v1510 = vand.u32 %v109, 4294901760
  %v1511 = vsub.f32 %v109, %v1510
  %v1512 = vand.u32 %v1511, 4294901760
  %v1513 = vsub.f32 %v1511, %v1512
  %v1514 = vand.u32 %v1513, 4294901760
  %1515 = vmatpush.xpose.msra.mxu0 %v1514
  %v1516 = vand.u32 %v106, 4294901760
  %v1517 = vsub.f32 %v106, %v1516
  %v1518 = vand.u32 %v1517, 4294901760
  %v1519 = vsub.f32 %v1517, %v1518
  %v1520 = vand.u32 %v1519, 4294901760
  %1521 = vmatpush.xpose.msra.mxu0 %v1520
  %v1522 = vand.u32 %v104, 4294901760
  %v1523 = vsub.f32 %v104, %v1522
  %v1524 = vand.u32 %v1523, 4294901760
  %v1525 = vsub.f32 %v1523, %v1524
  %v1526 = vand.u32 %v1525, 4294901760
  %1527 = vmatpush.xpose.msra.mxu0 %v1526
  %v1528 = vand.u32 %v137, 4294901760
  %1529 = vmatmul.f32.gmra.mxu0 %v1528
  %v1530 = vpop.f32.mrf.mxu0
  %v1531 = vadd.f32 %v1482, %v1530
  %v1532 = vand.u32 %v145, 4294901760
  %1533 = vmatmul.f32.gmra.mxu0 %v1532
  %v1534 = vpop.f32.mrf.mxu0
  %v1535 = vadd.f32 %v1490, %v1534
  %1536 = vdwg.mxu0
  %1537 = vmatpush.xpose.msra.mxu0 0.0
  %1538 = vmatpush.xpose.msra.mxu0 0.0
  %1539 = vmatpush.xpose.msra.mxu0 0.0
  %1540 = vmatpush.xpose.msra.mxu0 0.0
  %1541 = vmatpush.xpose.msra.mxu0 0.0
  %1542 = vmatpush.xpose.msra.mxu0 0.0
  %1543 = vmatpush.xpose.msra.mxu0 0.0
  %1544 = vmatpush.xpose.msra.mxu0 0.0
  %1545 = vmatpush.xpose.msra.mxu0 0.0
  %1546 = vmatpush.xpose.msra.mxu0 0.0
  %1547 = vmatpush.xpose.msra.mxu0 0.0
  %1548 = vmatpush.xpose.msra.mxu0 0.0
  %v1549 = vand.u32 %v111, 4294901760
  %v1550 = vsub.f32 %v111, %v1549
  %1551 = vmatpush.xpose.msra.mxu0 %v1550
  %v1552 = vand.u32 %v109, 4294901760
  %v1553 = vsub.f32 %v109, %v1552
  %1554 = vmatpush.xpose.msra.mxu0 %v1553
  %v1555 = vand.u32 %v106, 4294901760
  %v1556 = vsub.f32 %v106, %v1555
  %1557 = vmatpush.xpose.msra.mxu0 %v1556
  %v1558 = vand.u32 %v104, 4294901760
  %v1559 = vsub.f32 %v104, %v1558
  %1560 = vmatpush.xpose.msra.mxu0 %v1559
  %v1561 = vand.u32 %v137, 4294901760
  %v1562 = vsub.f32 %v137, %v1561
  %1563 = vmatmul.f32.gmra.mxu0 %v1562
  %v1564 = vpop.f32.mrf.mxu0
  %v1565 = vadd.f32 %v1531, %v1564
  %v1566 = vand.u32 %v145, 4294901760
  %v1567 = vsub.f32 %v145, %v1566
  %1568 = vmatmul.f32.gmra.mxu0 %v1567
  %v1569 = vpop.f32.mrf.mxu0
  %v1570 = vadd.f32 %v1535, %v1569
  %1571 = vdwg.mxu0
  %1572 = vmatpush.xpose.msra.mxu0 0.0
  %1573 = vmatpush.xpose.msra.mxu0 0.0
  %1574 = vmatpush.xpose.msra.mxu0 0.0
  %1575 = vmatpush.xpose.msra.mxu0 0.0
  %1576 = vmatpush.xpose.msra.mxu0 0.0
  %1577 = vmatpush.xpose.msra.mxu0 0.0
  %1578 = vmatpush.xpose.msra.mxu0 0.0
  %1579 = vmatpush.xpose.msra.mxu0 0.0
  %1580 = vmatpush.xpose.msra.mxu0 0.0
  %1581 = vmatpush.xpose.msra.mxu0 0.0
  %1582 = vmatpush.xpose.msra.mxu0 0.0
  %1583 = vmatpush.xpose.msra.mxu0 0.0
  %v1584 = vand.u32 %v111, 4294901760
  %1585 = vmatpush.xpose.msra.mxu0 %v1584
  %v1586 = vand.u32 %v109, 4294901760
  %1587 = vmatpush.xpose.msra.mxu0 %v1586
  %v1588 = vand.u32 %v106, 4294901760
  %1589 = vmatpush.xpose.msra.mxu0 %v1588
  %v1590 = vand.u32 %v104, 4294901760
  %1591 = vmatpush.xpose.msra.mxu0 %v1590
  %v1592 = vand.u32 %v137, 4294901760
  %v1593 = vsub.f32 %v137, %v1592
  %v1594 = vand.u32 %v1593, 4294901760
  %1595 = vmatmul.f32.gmra.mxu0 %v1594
  %v1596 = vpop.f32.mrf.mxu0
  %v1597 = vadd.f32 %v1565, %v1596
  %v1598 = vand.u32 %v145, 4294901760
  %v1599 = vsub.f32 %v145, %v1598
  %v1600 = vand.u32 %v1599, 4294901760
  %1601 = vmatmul.f32.gmra.mxu0 %v1600
  %v1602 = vpop.f32.mrf.mxu0
  %v1603 = vadd.f32 %v1570, %v1602
  %1604 = vdwg.mxu0
  %1605 = vmatpush.xpose.msra.mxu0 0.0
  %1606 = vmatpush.xpose.msra.mxu0 0.0
  %1607 = vmatpush.xpose.msra.mxu0 0.0
  %1608 = vmatpush.xpose.msra.mxu0 0.0
  %1609 = vmatpush.xpose.msra.mxu0 0.0
  %1610 = vmatpush.xpose.msra.mxu0 0.0
  %1611 = vmatpush.xpose.msra.mxu0 0.0
  %1612 = vmatpush.xpose.msra.mxu0 0.0
  %1613 = vmatpush.xpose.msra.mxu0 0.0
  %1614 = vmatpush.xpose.msra.mxu0 0.0
  %1615 = vmatpush.xpose.msra.mxu0 0.0
  %1616 = vmatpush.xpose.msra.mxu0 0.0
  %v1617 = vand.u32 %v111, 4294901760
  %v1618 = vsub.f32 %v111, %v1617
  %v1619 = vand.u32 %v1618, 4294901760
  %1620 = vmatpush.xpose.msra.mxu0 %v1619
  %v1621 = vand.u32 %v109, 4294901760
  %v1622 = vsub.f32 %v109, %v1621
  %v1623 = vand.u32 %v1622, 4294901760
  %1624 = vmatpush.xpose.msra.mxu0 %v1623
  %v1625 = vand.u32 %v106, 4294901760
  %v1626 = vsub.f32 %v106, %v1625
  %v1627 = vand.u32 %v1626, 4294901760
  %1628 = vmatpush.xpose.msra.mxu0 %v1627
  %v1629 = vand.u32 %v104, 4294901760
  %v1630 = vsub.f32 %v104, %v1629
  %v1631 = vand.u32 %v1630, 4294901760
  %1632 = vmatpush.xpose.msra.mxu0 %v1631
  %v1633 = vand.u32 %v137, 4294901760
  %1634 = vmatmul.f32.gmra.mxu0 %v1633
  %v1635 = vpop.f32.mrf.mxu0
  %v1636 = vadd.f32 %v1597, %v1635
  %v1637 = vand.u32 %v145, 4294901760
  %1638 = vmatmul.f32.gmra.mxu0 %v1637
  %v1639 = vpop.f32.mrf.mxu0
  %v1640 = vadd.f32 %v1603, %v1639
  %1641 = vdwg.mxu0
  %1642 = vmatpush.xpose.msra.mxu0 0.0
  %1643 = vmatpush.xpose.msra.mxu0 0.0
  %1644 = vmatpush.xpose.msra.mxu0 0.0
  %1645 = vmatpush.xpose.msra.mxu0 0.0
  %1646 = vmatpush.xpose.msra.mxu0 0.0
  %1647 = vmatpush.xpose.msra.mxu0 0.0
  %1648 = vmatpush.xpose.msra.mxu0 0.0
  %1649 = vmatpush.xpose.msra.mxu0 0.0
  %1650 = vmatpush.xpose.msra.mxu0 0.0
  %1651 = vmatpush.xpose.msra.mxu0 0.0
  %1652 = vmatpush.xpose.msra.mxu0 0.0
  %1653 = vmatpush.xpose.msra.mxu0 0.0
  %v1654 = vand.u32 %v111, 4294901760
  %1655 = vmatpush.xpose.msra.mxu0 %v1654
  %v1656 = vand.u32 %v109, 4294901760
  %1657 = vmatpush.xpose.msra.mxu0 %v1656
  %v1658 = vand.u32 %v106, 4294901760
  %1659 = vmatpush.xpose.msra.mxu0 %v1658
  %v1660 = vand.u32 %v104, 4294901760
  %1661 = vmatpush.xpose.msra.mxu0 %v1660
  %v1662 = vand.u32 %v137, 4294901760
  %1663 = vmatmul.f32.gmra.mxu0 %v1662
  %v1664 = vpop.f32.mrf.mxu0
  %v1665 = vadd.f32 %v1636, %v1664
  %v1666 = vand.u32 %v145, 4294901760
  %1667 = vmatmul.f32.gmra.mxu0 %v1666
  %v1668 = vpop.f32.mrf.mxu0
  %v1669 = vadd.f32 %v1640, %v1668
  %1670 = vdwg.mxu0
  %1671 = vmatpush.xpose.msra.mxu0 0.0
  %1672 = vmatpush.xpose.msra.mxu0 0.0
  %1673 = vmatpush.xpose.msra.mxu0 0.0
  %1674 = vmatpush.xpose.msra.mxu0 0.0
  %1675 = vmatpush.xpose.msra.mxu0 0.0
  %1676 = vmatpush.xpose.msra.mxu0 0.0
  %1677 = vmatpush.xpose.msra.mxu0 0.0
  %1678 = vmatpush.xpose.msra.mxu0 0.0
  %1679 = vmatpush.xpose.msra.mxu0 0.0
  %1680 = vmatpush.xpose.msra.mxu0 0.0
  %1681 = vmatpush.xpose.msra.mxu0 0.0
  %1682 = vmatpush.xpose.msra.mxu0 0.0
  %v1683 = vand.u32 %v126, 4294901760
  %1684 = vmatpush.xpose.msra.mxu0 %v1683
  %v1685 = vand.u32 %v124, 4294901760
  %1686 = vmatpush.xpose.msra.mxu0 %v1685
  %v1687 = vand.u32 %v121, 4294901760
  %1688 = vmatpush.xpose.msra.mxu0 %v1687
  %v1689 = vand.u32 %v119, 4294901760
  %1690 = vmatpush.xpose.msra.mxu0 %v1689
  %v1691 = vand.u32 %v138, 4294901760
  %v1692 = vsub.f32 %v138, %v1691
  %v1693 = vand.u32 %v1692, 4294901760
  %v1694 = vsub.f32 %v1692, %v1693
  %v1695 = vand.u32 %v1694, 4294901760
  %1696 = vmatmul.f32.gmra.mxu0 %v1695
  %v1697 = vpop.f32.mrf.mxu0
  %v1698 = vadd.f32 %v1665, %v1697
  %v1699 = vand.u32 %v146, 4294901760
  %v1700 = vsub.f32 %v146, %v1699
  %v1701 = vand.u32 %v1700, 4294901760
  %v1702 = vsub.f32 %v1700, %v1701
  %v1703 = vand.u32 %v1702, 4294901760
  %1704 = vmatmul.f32.gmra.mxu0 %v1703
  %v1705 = vpop.f32.mrf.mxu0
  %v1706 = vadd.f32 %v1669, %v1705
  %1707 = vdwg.mxu0
  %1708 = vmatpush.xpose.msra.mxu0 0.0
  %1709 = vmatpush.xpose.msra.mxu0 0.0
  %1710 = vmatpush.xpose.msra.mxu0 0.0
  %1711 = vmatpush.xpose.msra.mxu0 0.0
  %1712 = vmatpush.xpose.msra.mxu0 0.0
  %1713 = vmatpush.xpose.msra.mxu0 0.0
  %1714 = vmatpush.xpose.msra.mxu0 0.0
  %1715 = vmatpush.xpose.msra.mxu0 0.0
  %1716 = vmatpush.xpose.msra.mxu0 0.0
  %1717 = vmatpush.xpose.msra.mxu0 0.0
  %1718 = vmatpush.xpose.msra.mxu0 0.0
  %1719 = vmatpush.xpose.msra.mxu0 0.0
  %v1720 = vand.u32 %v126, 4294901760
  %v1721 = vsub.f32 %v126, %v1720
  %v1722 = vand.u32 %v1721, 4294901760
  %v1723 = vsub.f32 %v1721, %v1722
  %v1724 = vand.u32 %v1723, 4294901760
  %1725 = vmatpush.xpose.msra.mxu0 %v1724
  %v1726 = vand.u32 %v124, 4294901760
  %v1727 = vsub.f32 %v124, %v1726
  %v1728 = vand.u32 %v1727, 4294901760
  %v1729 = vsub.f32 %v1727, %v1728
  %v1730 = vand.u32 %v1729, 4294901760
  %1731 = vmatpush.xpose.msra.mxu0 %v1730
  %v1732 = vand.u32 %v121, 4294901760
  %v1733 = vsub.f32 %v121, %v1732
  %v1734 = vand.u32 %v1733, 4294901760
  %v1735 = vsub.f32 %v1733, %v1734
  %v1736 = vand.u32 %v1735, 4294901760
  %1737 = vmatpush.xpose.msra.mxu0 %v1736
  %v1738 = vand.u32 %v119, 4294901760
  %v1739 = vsub.f32 %v119, %v1738
  %v1740 = vand.u32 %v1739, 4294901760
  %v1741 = vsub.f32 %v1739, %v1740
  %v1742 = vand.u32 %v1741, 4294901760
  %1743 = vmatpush.xpose.msra.mxu0 %v1742
  %v1744 = vand.u32 %v138, 4294901760
  %1745 = vmatmul.f32.gmra.mxu0 %v1744
  %v1746 = vpop.f32.mrf.mxu0
  %v1747 = vadd.f32 %v1698, %v1746
  %v1748 = vand.u32 %v146, 4294901760
  %1749 = vmatmul.f32.gmra.mxu0 %v1748
  %v1750 = vpop.f32.mrf.mxu0
  %v1751 = vadd.f32 %v1706, %v1750
  %1752 = vdwg.mxu0
  %1753 = vmatpush.xpose.msra.mxu0 0.0
  %1754 = vmatpush.xpose.msra.mxu0 0.0
  %1755 = vmatpush.xpose.msra.mxu0 0.0
  %1756 = vmatpush.xpose.msra.mxu0 0.0
  %1757 = vmatpush.xpose.msra.mxu0 0.0
  %1758 = vmatpush.xpose.msra.mxu0 0.0
  %1759 = vmatpush.xpose.msra.mxu0 0.0
  %1760 = vmatpush.xpose.msra.mxu0 0.0
  %1761 = vmatpush.xpose.msra.mxu0 0.0
  %1762 = vmatpush.xpose.msra.mxu0 0.0
  %1763 = vmatpush.xpose.msra.mxu0 0.0
  %1764 = vmatpush.xpose.msra.mxu0 0.0
  %v1765 = vand.u32 %v126, 4294901760
  %v1766 = vsub.f32 %v126, %v1765
  %1767 = vmatpush.xpose.msra.mxu0 %v1766
  %v1768 = vand.u32 %v124, 4294901760
  %v1769 = vsub.f32 %v124, %v1768
  %1770 = vmatpush.xpose.msra.mxu0 %v1769
  %v1771 = vand.u32 %v121, 4294901760
  %v1772 = vsub.f32 %v121, %v1771
  %1773 = vmatpush.xpose.msra.mxu0 %v1772
  %v1774 = vand.u32 %v119, 4294901760
  %v1775 = vsub.f32 %v119, %v1774
  %1776 = vmatpush.xpose.msra.mxu0 %v1775
  %v1777 = vand.u32 %v138, 4294901760
  %v1778 = vsub.f32 %v138, %v1777
  %1779 = vmatmul.f32.gmra.mxu0 %v1778
  %v1780 = vpop.f32.mrf.mxu0
  %v1781 = vadd.f32 %v1747, %v1780
  %v1782 = vand.u32 %v146, 4294901760
  %v1783 = vsub.f32 %v146, %v1782
  %1784 = vmatmul.f32.gmra.mxu0 %v1783
  %v1785 = vpop.f32.mrf.mxu0
  %v1786 = vadd.f32 %v1751, %v1785
  %1787 = vdwg.mxu0
  %1788 = vmatpush.xpose.msra.mxu0 0.0
  %1789 = vmatpush.xpose.msra.mxu0 0.0
  %1790 = vmatpush.xpose.msra.mxu0 0.0
  %1791 = vmatpush.xpose.msra.mxu0 0.0
  %1792 = vmatpush.xpose.msra.mxu0 0.0
  %1793 = vmatpush.xpose.msra.mxu0 0.0
  %1794 = vmatpush.xpose.msra.mxu0 0.0
  %1795 = vmatpush.xpose.msra.mxu0 0.0
  %1796 = vmatpush.xpose.msra.mxu0 0.0
  %1797 = vmatpush.xpose.msra.mxu0 0.0
  %1798 = vmatpush.xpose.msra.mxu0 0.0
  %1799 = vmatpush.xpose.msra.mxu0 0.0
  %v1800 = vand.u32 %v126, 4294901760
  %1801 = vmatpush.xpose.msra.mxu0 %v1800
  %v1802 = vand.u32 %v124, 4294901760
  %1803 = vmatpush.xpose.msra.mxu0 %v1802
  %v1804 = vand.u32 %v121, 4294901760
  %1805 = vmatpush.xpose.msra.mxu0 %v1804
  %v1806 = vand.u32 %v119, 4294901760
  %1807 = vmatpush.xpose.msra.mxu0 %v1806
  %v1808 = vand.u32 %v138, 4294901760
  %v1809 = vsub.f32 %v138, %v1808
  %v1810 = vand.u32 %v1809, 4294901760
  %1811 = vmatmul.f32.gmra.mxu0 %v1810
  %v1812 = vpop.f32.mrf.mxu0
  %v1813 = vadd.f32 %v1781, %v1812
  %v1814 = vand.u32 %v146, 4294901760
  %v1815 = vsub.f32 %v146, %v1814
  %v1816 = vand.u32 %v1815, 4294901760
  %1817 = vmatmul.f32.gmra.mxu0 %v1816
  %v1818 = vpop.f32.mrf.mxu0
  %v1819 = vadd.f32 %v1786, %v1818
  %1820 = vdwg.mxu0
  %1821 = vmatpush.xpose.msra.mxu0 0.0
  %1822 = vmatpush.xpose.msra.mxu0 0.0
  %1823 = vmatpush.xpose.msra.mxu0 0.0
  %1824 = vmatpush.xpose.msra.mxu0 0.0
  %1825 = vmatpush.xpose.msra.mxu0 0.0
  %1826 = vmatpush.xpose.msra.mxu0 0.0
  %1827 = vmatpush.xpose.msra.mxu0 0.0
  %1828 = vmatpush.xpose.msra.mxu0 0.0
  %1829 = vmatpush.xpose.msra.mxu0 0.0
  %1830 = vmatpush.xpose.msra.mxu0 0.0
  %1831 = vmatpush.xpose.msra.mxu0 0.0
  %1832 = vmatpush.xpose.msra.mxu0 0.0
  %v1833 = vand.u32 %v126, 4294901760
  %v1834 = vsub.f32 %v126, %v1833
  %v1835 = vand.u32 %v1834, 4294901760
  %1836 = vmatpush.xpose.msra.mxu0 %v1835
  %v1837 = vand.u32 %v124, 4294901760
  %v1838 = vsub.f32 %v124, %v1837
  %v1839 = vand.u32 %v1838, 4294901760
  %1840 = vmatpush.xpose.msra.mxu0 %v1839
  %v1841 = vand.u32 %v121, 4294901760
  %v1842 = vsub.f32 %v121, %v1841
  %v1843 = vand.u32 %v1842, 4294901760
  %1844 = vmatpush.xpose.msra.mxu0 %v1843
  %v1845 = vand.u32 %v119, 4294901760
  %v1846 = vsub.f32 %v119, %v1845
  %v1847 = vand.u32 %v1846, 4294901760
  %1848 = vmatpush.xpose.msra.mxu0 %v1847
  %v1849 = vand.u32 %v138, 4294901760
  %1850 = vmatmul.f32.gmra.mxu0 %v1849
  %v1851 = vpop.f32.mrf.mxu0
  %v1852 = vadd.f32 %v1813, %v1851
  %v1853 = vand.u32 %v146, 4294901760
  %1854 = vmatmul.f32.gmra.mxu0 %v1853
  %v1855 = vpop.f32.mrf.mxu0
  %v1856 = vadd.f32 %v1819, %v1855
  %1857 = vdwg.mxu0
  %1858 = vmatpush.xpose.msra.mxu0 0.0
  %1859 = vmatpush.xpose.msra.mxu0 0.0
  %1860 = vmatpush.xpose.msra.mxu0 0.0
  %1861 = vmatpush.xpose.msra.mxu0 0.0
  %1862 = vmatpush.xpose.msra.mxu0 0.0
  %1863 = vmatpush.xpose.msra.mxu0 0.0
  %1864 = vmatpush.xpose.msra.mxu0 0.0
  %1865 = vmatpush.xpose.msra.mxu0 0.0
  %1866 = vmatpush.xpose.msra.mxu0 0.0
  %1867 = vmatpush.xpose.msra.mxu0 0.0
  %1868 = vmatpush.xpose.msra.mxu0 0.0
  %1869 = vmatpush.xpose.msra.mxu0 0.0
  %v1870 = vand.u32 %v126, 4294901760
  %1871 = vmatpush.xpose.msra.mxu0 %v1870
  %v1872 = vand.u32 %v124, 4294901760
  %1873 = vmatpush.xpose.msra.mxu0 %v1872
  %v1874 = vand.u32 %v121, 4294901760
  %1875 = vmatpush.xpose.msra.mxu0 %v1874
  %v1876 = vand.u32 %v119, 4294901760
  %1877 = vmatpush.xpose.msra.mxu0 %v1876
  %v1878 = vand.u32 %v138, 4294901760
  %1879 = vmatmul.f32.gmra.mxu0 %v1878
  %v1880 = vpop.f32.mrf.mxu0
  %v1881 = vadd.f32 %v1852, %v1880
  %v1882 = vand.u32 %v146, 4294901760
  %1883 = vmatmul.f32.gmra.mxu0 %v1882
  %v1884 = vpop.f32.mrf.mxu0
  %v1885 = vadd.f32 %v1856, %v1884
  %1886 = vdwg.mxu0
  %v1887 = vtanh.pop %v1881
  %v1888 = vtanh.pop %v1885
  %vm1889 = vcmask 261120
  %1890 = vst.msk [vmem:[%s3] sm:$0xff] %vm1889, %v1887
  %vm1891 = vcmask 254976
  %1892 = vst.msk [vmem:[%s3 + $0x8] sm:$0x3] %vm1891, %v1888
  // Predicated region
  $region14: #{forward.1} parent=0 // pred_check
    _
  $region15: #{forward.1} parent=0 // pred_check_branch
    %1894 = sbr.rel (0) target = $region17
  $region16: #{forward.1} parent=0 // pred_region
    _
  $region17: #{forward.1} parent=0 // pred_fallthru
    _
  // Predicated region
  $region18: #{forward.1} parent=0 // pred_check
    _
  $region19: #{forward.1} parent=0 // pred_check_branch
    %1896 = sbr.rel (0) target = $region21
  $region20: #{forward.1} parent=0 // pred_region
    _
  $region21: #{forward.1} parent=0 // pred_fallthru
    _

</llo_original>
